<compile_context>
chip_gen: v7x
topology: tpu7x:2x2x1
jax: 0.10.0
libtpu: 0.0.40
codegen_flags: <defaults>
</compile_context>

<pallas_src>
import functools

import jax
import jax.numpy as jnp
import numpy as np
from jax.experimental import pallas as pl
from jax.experimental.pallas import tpu as pltpu


_LANE = 128
_SUBLANE = 8
_NEG_INF = -1e30        # finite "minus infinity" for masked logits


def _cdiv(a, b):
    return -(-a // b)


def _round_up(n, m):
    return ((n + m - 1) // m) * m


def _feat_dtype():
    """tanh/feature dtype: bf16 where the EUP supports it (v6e/v7x), else f32."""
    try:
        kind = jax.devices()[0].device_kind.lower()
    except Exception:
        return jnp.float32
    if "v6" in kind or "v7" in kind or "7x" in kind:
        return jnp.bfloat16
    return jnp.float32


def _vmem_limit_bytes():
    phys = 64 * 1024 * 1024          # conservative default (v7x per-core VMEM)
    try:
        if jax.devices()[0].platform == "tpu":
            phys = int(getattr(pltpu.get_tpu_info(), "vmem_capacity_bytes", phys))
    except Exception:
        pass
    return min(phys * 3 // 4, 100 * 1024 * 1024)


def _derive_tiles(B, Q, K, H, Dv, block_q, block_k, vmem_limit):
    """Pick (bb, tq, tk, Qp, Kp): sublane-aligned Q tiles, lane-aligned K tiles,
    minimal padding, batch folding bounded by a VMEM budget."""
    block_q = _round_up(max(block_q, _SUBLANE), _SUBLANE)
    block_k = _round_up(max(block_k, _LANE), _LANE)
    nq = _cdiv(Q, block_q)
    tq = _round_up(_cdiv(Q, nq), _SUBLANE)
    Qp = tq * nq
    nk = _cdiv(K, block_k)
    tk = _round_up(_cdiv(K, nk), _LANE)
    Kp = tk * nk

    # Rough per-batch-element VMEM footprint: f32 score/p temporaries,
    # double-buffered bf16 input blocks, f32 accumulator + output blocks.
    per_b = (4 * 4 * tq * tk
             + 2 * 2 * (tq * H + H * tk + tk * Dv)
             + 3 * 4 * tq * Dv
             + 2 * 4 * tq)
    budget = vmem_limit // 2
    bb = max(1, min(B, budget // max(per_b, 1)))
    # Keep at least two parallel grid steps so multi-TensorCore chips (v7x)
    # have something to shard across cores.
    if bb > 1 and (B // bb) * (Qp // tq) < 2:
        bb = max(1, bb // 2)
    while B % bb:
        bb -= 1
    return bb, tq, tk, Qp, Kp


def _additive_attn_kernel(qp_ref, kpt_ref, v_ref, wv_ref, o_ref,
                          m_ref, l_ref, acc_ref, *, kv_len, feat_dtype):
    """One (batch-block, Q-tile, K-tile) step; online softmax over the K axis."""
    k_step = pl.program_id(2)

    @pl.when(k_step == 0)
    def _init():
        m_ref[...] = jnp.full(m_ref.shape, _NEG_INF, dtype=m_ref.dtype)
        l_ref[...] = jnp.zeros(l_ref.shape, dtype=l_ref.dtype)
        acc_ref[...] = jnp.zeros(acc_ref.shape, dtype=acc_ref.dtype)

    bb, tq, H = qp_ref.shape
    tk = kpt_ref.shape[-1]

    # scores[b,q,k] = sum_h wv[h] * tanh(qp[b,q,h] + kp[b,k,h]).
    # Statically unrolled reduction over H: each step is a (bb,tq,1)+(bb,1,tk)
    # broadcast add, an EUP tanh, and an SMEM-scalar multiply-accumulate into a
    # single lane-dense (bb,tq,tk) f32 tile (no rank-4 intermediates).
    scores = None
    for h in range(H):
        q_h = qp_ref[:, :, h:h + 1].astype(feat_dtype)    # (bb, tq, 1)
        k_h = kpt_ref[:, h:h + 1, :].astype(feat_dtype)   # (bb, 1, tk)
        feat_h = jnp.tanh(q_h + k_h).astype(jnp.float32)  # (bb, tq, tk)
        term = wv_ref[h] * feat_h                         # SMEM scalar * vector
        scores = term if scores is None else scores + term

    # Mask the logical K -> padded-K tail (padding keeps tk lane-aligned).
    if kv_len % tk != 0:
        col = (jax.lax.broadcasted_iota(jnp.int32, (bb, tq, tk), 2)
               + k_step * tk)
        scores = jnp.where(col < kv_len, scores, _NEG_INF)

    # Online-softmax update (valid_lens=None -> plain softmax over K).
    m_prev = m_ref[...]
    m_new = jnp.maximum(m_prev, jnp.max(scores, axis=-1, keepdims=True))
    alpha = jnp.exp(m_prev - m_new)
    p = jnp.exp(scores - m_new)                           # f32 weights in [0,1]
    l_ref[...] = alpha * l_ref[...] + jnp.sum(p, axis=-1, keepdims=True)
    acc_ref[...] = alpha * acc_ref[...] + jnp.einsum(
        "bqk,bkd->bqd",
        p.astype(jnp.bfloat16), v_ref[...].astype(jnp.bfloat16),
        preferred_element_type=jnp.float32)
    m_ref[...] = m_new

    @pl.when(k_step == pl.num_programs(2) - 1)
    def _finalize():
        inv_l = pl.reciprocal(l_ref[...], approx=True)
        o_ref[...] = (acc_ref[...] * inv_l).astype(o_ref.dtype)


def additive_attention(queries, keys, values, wq, wk, wv, *,
                       block_q=512, block_k=512):
    """queries (B,Q,Dq), keys (B,K,Dk), values (B,K,Dv);
    wq (Dq,H), wk (Dk,H), wv (1,H) -- nn.Linear weights stored transposed."""
    B, Q, _ = queries.shape
    _, K, _ = keys.shape
    _, _, Dv = values.shape
    H = wq.shape[1]
    out_dtype = queries.dtype
    feat_dtype = _feat_dtype()
    vmem_limit = _vmem_limit_bytes()

    # Hoisted projections as two batched XLA matmuls; qp/kpt/V streamed as bf16
    # (halves the DMA for the streams that are re-read once per Q tile).
    qp = jnp.einsum("bqd,dh->bqh", queries, wq).astype(jnp.bfloat16)   # (B,Q,H)
    kpt = jnp.einsum("bkd,dh->bhk", keys, wk).astype(jnp.bfloat16)     # (B,H,K)
    v_b = values.astype(jnp.bfloat16)                                  # (B,K,Dv)
    wv_vec = wv.reshape(H).astype(jnp.float32)                         # (H,) SMEM

    bb, tq, tk, Qp, Kp = _derive_tiles(B, Q, K, H, Dv, block_q, block_k,
                                       vmem_limit)

    # Zero-pad Q to a multiple of tq (rows sliced off below) and K to a
    # multiple of the lane-aligned tk (masked to -1e30 inside the kernel).
    if Qp != Q:
        qp = jnp.pad(qp, ((0, 0), (0, Qp - Q), (0, 0)))
    if Kp != K:
        kpt = jnp.pad(kpt, ((0, 0), (0, 0), (0, Kp - K)))
        v_b = jnp.pad(v_b, ((0, 0), (0, Kp - K), (0, 0)))

    grid = (B // bb, Qp // tq, Kp // tk)
    n_q_tiles = Qp // tq

    cost = pl.CostEstimate(
        flops=int(2 * B * Qp * Kp * (H + Dv)),
        transcendentals=int(B * Qp * Kp * (H + 1)),
        bytes_accessed=int(qp.size * 2
                           + (kpt.size * 2 + v_b.size * 2) * n_q_tiles
                           + B * Qp * Dv * 4),
    )

    kernel = functools.partial(_additive_attn_kernel, kv_len=K,
                               feat_dtype=feat_dtype)

    out = pl.pallas_call(
        kernel,
        out_shape=jax.ShapeDtypeStruct((B, Qp, Dv), out_dtype),
        grid_spec=pltpu.PrefetchScalarGridSpec(
            num_scalar_prefetch=0,
            grid=grid,
            in_specs=[
                pl.BlockSpec((bb, tq, H), lambda b, q, k: (b, q, 0)),
                pl.BlockSpec((bb, H, tk), lambda b, q, k: (b, 0, k)),
                pl.BlockSpec((bb, tk, Dv), lambda b, q, k: (b, k, 0)),
                pl.BlockSpec(memory_space=pltpu.MemorySpace.SMEM),     # wv
            ],
            out_specs=pl.BlockSpec((bb, tq, Dv), lambda b, q, k: (b, q, 0)),
            scratch_shapes=[
                pltpu.VMEM((bb, tq, 1), jnp.float32),    # running max
                pltpu.VMEM((bb, tq, 1), jnp.float32),    # running denom
                pltpu.VMEM((bb, tq, Dv), jnp.float32),   # output accumulator
            ],
        ),
        compiler_params=pltpu.CompilerParams(
            dimension_semantics=("parallel", "parallel", "arbitrary"),
            vmem_limit_bytes=int(vmem_limit),
        ),
        cost_estimate=cost,
    )(qp, kpt, v_b, wv_vec)

    return out if Qp == Q else out[:, :Q, :]


def reference(queries, keys, values, wq, wk, wv):
    qp = queries @ wq                                          # (B,Q,H)
    kp = keys @ wk                                             # (B,K,H)
    feat = jnp.tanh(qp[:, :, None, :] + kp[:, None, :, :])     # (B,Q,K,H)
    scores = jnp.einsum("bqkh,h->bqk", feat, wv[0])
    w = jax.nn.softmax(scores, axis=-1)
    return jnp.einsum("bqk,bkd->bqd", w, values)


if __name__ == "__main__":
    # Shapes consistent with the module: batch=2, seq_q=seq_k=8,
    # query_size=key_size=16, num_hiddens=32, value dim=16.
    B, Q, K = 2, 8, 8
    query_size, key_size, num_hiddens, value_dim = 16, 16, 32, 16

    root = jax.random.PRNGKey(0)
    k_q, k_k, k_v, k_wq, k_wk, k_wv = jax.random.split(root, 6)

    queries = jax.random.normal(k_q, (B, Q, query_size), jnp.float32)
    keys = jax.random.normal(k_k, (B, K, key_size), jnp.float32)
    values = jax.random.normal(k_v, (B, K, value_dim), jnp.float32)

    # nn.Linear weights (bias=False), stored transposed for x @ W.
    wq = 0.1 * jax.random.normal(k_wq, (query_size, num_hiddens), jnp.float32)
    wk = 0.1 * jax.random.normal(k_wk, (key_size, num_hiddens), jnp.float32)
    wv = 0.1 * jax.random.normal(k_wv, (1, num_hiddens), jnp.float32)

    # bf16 qp/kpt/V streams + bf16 p@V matmul + approx softmax reciprocal
    # (+ bf16 tanh on v6e/v7x) => compare against the f32 reference with a
    # matching tolerance.
    tol = dict(atol=2e-2, rtol=2e-2)

    out = jax.block_until_ready(
        additive_attention(queries, keys, values, wq, wk, wv))
    ref = reference(queries, keys, values, wq, wk, wv)
    assert out.shape == (B, Q, value_dim)
    assert np.allclose(np.asarray(out), np.asarray(ref), **tol), (
        float(np.abs(np.asarray(out) - np.asarray(ref)).max()))

    # Multiple K tiles -> exercises the online-softmax accumulation path.
    B2, Q2, K2 = 2, 16, 256
    kq2, kk2, kv2 = jax.random.split(jax.random.PRNGKey(1), 3)
    q2 = jax.random.normal(kq2, (B2, Q2, query_size), jnp.float32)
    k2 = jax.random.normal(kk2, (B2, K2, key_size), jnp.float32)
    v2 = jax.random.normal(kv2, (B2, K2, value_dim), jnp.float32)
    out2 = jax.block_until_ready(
        additive_attention(q2, k2, v2, wq, wk, wv, block_k=128))
    ref2 = reference(q2, k2, v2, wq, wk, wv)
    assert out2.shape == (B2, Q2, value_dim)
    assert np.allclose(np.asarray(out2), np.asarray(ref2), **tol), (
        float(np.abs(np.asarray(out2) - np.asarray(ref2)).max()))

    # Unaligned K (masked tail), multiple Q tiles, folded batch, unaligned Dv.
    B3, Q3, K3, Dv3 = 4, 32, 160, 24
    kq3, kk3, kv3 = jax.random.split(jax.random.PRNGKey(2), 3)
    q3 = jax.random.normal(kq3, (B3, Q3, query_size), jnp.float32)
    k3 = jax.random.normal(kk3, (B3, K3, key_size), jnp.float32)
    v3 = jax.random.normal(kv3, (B3, K3, Dv3), jnp.float32)
    out3 = jax.block_until_ready(
        additive_attention(q3, k3, v3, wq, wk, wv, block_q=16, block_k=128))
    ref3 = reference(q3, k3, v3, wq, wk, wv)
    assert out3.shape == (B3, Q3, Dv3)
    assert np.allclose(np.asarray(out3), np.asarray(ref3), **tol), (
        float(np.abs(np.asarray(out3) - np.asarray(ref3)).max()))

    # TODO(synk): valid_lens masked-softmax argument and train-mode dropout are
    # not implemented (this is the valid_lens=None / eval-mode forward path).
    print("KERNEL_OK")
</pallas_src>

<mosaic_0001>
module attributes {stable_mosaic.version = 11 : i64} {
  func.func @_additive_attn_kernel(%arg0: i32, %arg1: i32, %arg2: i32, %arg3: memref<1x8x32xbf16, #tpu.memory_space<vmem>>, %arg4: memref<1x32x128xbf16, #tpu.memory_space<vmem>>, %arg5: memref<1x128x16xbf16, #tpu.memory_space<vmem>>, %arg6: memref<32xf32, #tpu.memory_space<smem>>, %arg7: memref<1x8x16xf32, #tpu.memory_space<vmem>>, %arg8: memref<1x8x1xf32, #tpu.memory_space<vmem>>, %arg9: memref<1x8x1xf32, #tpu.memory_space<vmem>>, %arg10: memref<1x8x16xf32, #tpu.memory_space<vmem>>) attributes {dimension_semantics = [#tpu.dimension_semantics<parallel>, #tpu.dimension_semantics<parallel>, #tpu.dimension_semantics<arbitrary>], iteration_bounds = array<i64: 2, 1, 1>, scalar_prefetch = 0 : i64, scratch_operands = 3 : i64, tpu.core_type = #tpu.core_type<tc>, window_params = [{transform_indices = @transform_0, window_bounds = array<i64: 1, 8, 32>}, {transform_indices = @transform_1, window_bounds = array<i64: 1, 32, 128>}, {transform_indices = @transform_2, window_bounds = array<i64: 1, 128, 16>}, {transform_indices = @transform_3, window_bounds = array<i64: 32>}, {transform_indices = @transform_4, window_bounds = array<i64: 1, 8, 16>}]} {
    %c0_i32 = arith.constant 0 : i32
    %0 = arith.cmpi eq, %arg2, %c0_i32 : i32
    %1 = arith.extui %0 : i1 to i32
    %c0_i32_0 = arith.constant 0 : i32
    %2 = arith.cmpi ne, %1, %c0_i32_0 : i32
    scf.if %2 {
      %cst_219 = arith.constant -1.000000e+30 : f32
      %421 = vector.broadcast %cst_219 : f32 to vector<1x8x1xf32>
      %c0_220 = arith.constant 0 : index
      %c0_221 = arith.constant 0 : index
      %c0_222 = arith.constant 0 : index
      %422 = vector.load %arg8[%c0_220, %c0_221, %c0_222] : memref<1x8x1xf32, #tpu.memory_space<vmem>>, vector<1x8x1xf32>
      tpu.vector_store %arg8[%c0_220, %c0_221, %c0_222], %421 {strides = array<i32>} : memref<1x8x1xf32, #tpu.memory_space<vmem>>, vector<1x8x1xf32>,
      %cst_223 = arith.constant 0.000000e+00 : f32
      %423 = vector.broadcast %cst_223 : f32 to vector<1x8x1xf32>
      %c0_224 = arith.constant 0 : index
      %c0_225 = arith.constant 0 : index
      %c0_226 = arith.constant 0 : index
      %424 = vector.load %arg9[%c0_224, %c0_225, %c0_226] : memref<1x8x1xf32, #tpu.memory_space<vmem>>, vector<1x8x1xf32>
      tpu.vector_store %arg9[%c0_224, %c0_225, %c0_226], %423 {strides = array<i32>} : memref<1x8x1xf32, #tpu.memory_space<vmem>>, vector<1x8x1xf32>,
      %cst_227 = arith.constant 0.000000e+00 : f32
      %425 = vector.broadcast %cst_227 : f32 to vector<1x8x16xf32>
      %c0_228 = arith.constant 0 : index
      %c0_229 = arith.constant 0 : index
      %c0_230 = arith.constant 0 : index
      %426 = vector.load %arg10[%c0_228, %c0_229, %c0_230] : memref<1x8x16xf32, #tpu.memory_space<vmem>>, vector<1x8x16xf32>
      tpu.vector_store %arg10[%c0_228, %c0_229, %c0_230], %425 {strides = array<i32>} : memref<1x8x16xf32, #tpu.memory_space<vmem>>, vector<1x8x16xf32>,
    } else {
    }
    %c0 = arith.constant 0 : index
    %c0_1 = arith.constant 0 : index
    %c0_2 = arith.constant 0 : index
    %3 = vector.load %arg3[%c0, %c0_1, %c0_2] : memref<1x8x32xbf16, #tpu.memory_space<vmem>>, vector<1x8x1xbf16>
    %4 = arith.extf %3 : vector<1x8x1xbf16> to vector<1x8x1xf32>
    %c0_3 = arith.constant 0 : index
    %c0_4 = arith.constant 0 : index
    %c0_5 = arith.constant 0 : index
    %5 = vector.load %arg4[%c0_3, %c0_4, %c0_5] : memref<1x32x128xbf16, #tpu.memory_space<vmem>>, vector<1x1x128xbf16>
    %6 = arith.extf %5 : vector<1x1x128xbf16> to vector<1x1x128xf32>
    %7 = vector.broadcast %4 : vector<1x8x1xf32> to vector<1x8x128xf32>
    %8 = vector.broadcast %6 : vector<1x1x128xf32> to vector<1x8x128xf32>
    %9 = arith.addf %7, %8 : vector<1x8x128xf32>
    %10 = math.tanh %9 : vector<1x8x128xf32>
    %c0_6 = arith.constant 0 : index
    %11 = memref.load %arg6[%c0_6] : memref<32xf32, #tpu.memory_space<smem>>
    %12 = vector.broadcast %11 : f32 to vector<1x8x128xf32>
    %13 = arith.mulf %12, %10 : vector<1x8x128xf32>
    %c0_7 = arith.constant 0 : index
    %c0_8 = arith.constant 0 : index
    %c1 = arith.constant 1 : index
    %14 = vector.load %arg3[%c0_7, %c0_8, %c1] : memref<1x8x32xbf16, #tpu.memory_space<vmem>>, vector<1x8x1xbf16>
    %15 = arith.extf %14 : vector<1x8x1xbf16> to vector<1x8x1xf32>
    %c0_9 = arith.constant 0 : index
    %c1_10 = arith.constant 1 : index
    %c0_11 = arith.constant 0 : index
    %16 = vector.load %arg4[%c0_9, %c1_10, %c0_11] : memref<1x32x128xbf16, #tpu.memory_space<vmem>>, vector<1x1x128xbf16>
    %17 = arith.extf %16 : vector<1x1x128xbf16> to vector<1x1x128xf32>
    %18 = vector.broadcast %15 : vector<1x8x1xf32> to vector<1x8x128xf32>
    %19 = vector.broadcast %17 : vector<1x1x128xf32> to vector<1x8x128xf32>
    %20 = arith.addf %18, %19 : vector<1x8x128xf32>
    %21 = math.tanh %20 : vector<1x8x128xf32>
    %c1_12 = arith.constant 1 : index
    %22 = memref.load %arg6[%c1_12] : memref<32xf32, #tpu.memory_space<smem>>
    %23 = vector.broadcast %22 : f32 to vector<1x8x128xf32>
    %24 = arith.mulf %23, %21 : vector<1x8x128xf32>
    %25 = arith.addf %13, %24 : vector<1x8x128xf32>
    %c0_13 = arith.constant 0 : index
    %c0_14 = arith.constant 0 : index
    %c2 = arith.constant 2 : index
    %26 = vector.load %arg3[%c0_13, %c0_14, %c2] : memref<1x8x32xbf16, #tpu.memory_space<vmem>>, vector<1x8x1xbf16>
    %27 = arith.extf %26 : vector<1x8x1xbf16> to vector<1x8x1xf32>
    %c0_15 = arith.constant 0 : index
    %c2_16 = arith.constant 2 : index
    %c0_17 = arith.constant 0 : index
    %28 = vector.load %arg4[%c0_15, %c2_16, %c0_17] : memref<1x32x128xbf16, #tpu.memory_space<vmem>>, vector<1x1x128xbf16>
    %29 = arith.extf %28 : vector<1x1x128xbf16> to vector<1x1x128xf32>
    %30 = vector.broadcast %27 : vector<1x8x1xf32> to vector<1x8x128xf32>
    %31 = vector.broadcast %29 : vector<1x1x128xf32> to vector<1x8x128xf32>
    %32 = arith.addf %30, %31 : vector<1x8x128xf32>
    %33 = math.tanh %32 : vector<1x8x128xf32>
    %c2_18 = arith.constant 2 : index
    %34 = memref.load %arg6[%c2_18] : memref<32xf32, #tpu.memory_space<smem>>
    %35 = vector.broadcast %34 : f32 to vector<1x8x128xf32>
    %36 = arith.mulf %35, %33 : vector<1x8x128xf32>
    %37 = arith.addf %25, %36 : vector<1x8x128xf32>
    %c0_19 = arith.constant 0 : index
    %c0_20 = arith.constant 0 : index
    %c3 = arith.constant 3 : index
    %38 = vector.load %arg3[%c0_19, %c0_20, %c3] : memref<1x8x32xbf16, #tpu.memory_space<vmem>>, vector<1x8x1xbf16>
    %39 = arith.extf %38 : vector<1x8x1xbf16> to vector<1x8x1xf32>
    %c0_21 = arith.constant 0 : index
    %c3_22 = arith.constant 3 : index
    %c0_23 = arith.constant 0 : index
    %40 = vector.load %arg4[%c0_21, %c3_22, %c0_23] : memref<1x32x128xbf16, #tpu.memory_space<vmem>>, vector<1x1x128xbf16>
    %41 = arith.extf %40 : vector<1x1x128xbf16> to vector<1x1x128xf32>
    %42 = vector.broadcast %39 : vector<1x8x1xf32> to vector<1x8x128xf32>
    %43 = vector.broadcast %41 : vector<1x1x128xf32> to vector<1x8x128xf32>
    %44 = arith.addf %42, %43 : vector<1x8x128xf32>
    %45 = math.tanh %44 : vector<1x8x128xf32>
    %c3_24 = arith.constant 3 : index
    %46 = memref.load %arg6[%c3_24] : memref<32xf32, #tpu.memory_space<smem>>
    %47 = vector.broadcast %46 : f32 to vector<1x8x128xf32>
    %48 = arith.mulf %47, %45 : vector<1x8x128xf32>
    %49 = arith.addf %37, %48 : vector<1x8x128xf32>
    %c0_25 = arith.constant 0 : index
    %c0_26 = arith.constant 0 : index
    %c4 = arith.constant 4 : index
    %50 = vector.load %arg3[%c0_25, %c0_26, %c4] : memref<1x8x32xbf16, #tpu.memory_space<vmem>>, vector<1x8x1xbf16>
    %51 = arith.extf %50 : vector<1x8x1xbf16> to vector<1x8x1xf32>
    %c0_27 = arith.constant 0 : index
    %c4_28 = arith.constant 4 : index
    %c0_29 = arith.constant 0 : index
    %52 = vector.load %arg4[%c0_27, %c4_28, %c0_29] : memref<1x32x128xbf16, #tpu.memory_space<vmem>>, vector<1x1x128xbf16>
    %53 = arith.extf %52 : vector<1x1x128xbf16> to vector<1x1x128xf32>
    %54 = vector.broadcast %51 : vector<1x8x1xf32> to vector<1x8x128xf32>
    %55 = vector.broadcast %53 : vector<1x1x128xf32> to vector<1x8x128xf32>
    %56 = arith.addf %54, %55 : vector<1x8x128xf32>
    %57 = math.tanh %56 : vector<1x8x128xf32>
    %c4_30 = arith.constant 4 : index
    %58 = memref.load %arg6[%c4_30] : memref<32xf32, #tpu.memory_space<smem>>
    %59 = vector.broadcast %58 : f32 to vector<1x8x128xf32>
    %60 = arith.mulf %59, %57 : vector<1x8x128xf32>
    %61 = arith.addf %49, %60 : vector<1x8x128xf32>
    %c0_31 = arith.constant 0 : index
    %c0_32 = arith.constant 0 : index
    %c5 = arith.constant 5 : index
    %62 = vector.load %arg3[%c0_31, %c0_32, %c5] : memref<1x8x32xbf16, #tpu.memory_space<vmem>>, vector<1x8x1xbf16>
    %63 = arith.extf %62 : vector<1x8x1xbf16> to vector<1x8x1xf32>
    %c0_33 = arith.constant 0 : index
    %c5_34 = arith.constant 5 : index
    %c0_35 = arith.constant 0 : index
    %64 = vector.load %arg4[%c0_33, %c5_34, %c0_35] : memref<1x32x128xbf16, #tpu.memory_space<vmem>>, vector<1x1x128xbf16>
    %65 = arith.extf %64 : vector<1x1x128xbf16> to vector<1x1x128xf32>
    %66 = vector.broadcast %63 : vector<1x8x1xf32> to vector<1x8x128xf32>
    %67 = vector.broadcast %65 : vector<1x1x128xf32> to vector<1x8x128xf32>
    %68 = arith.addf %66, %67 : vector<1x8x128xf32>
    %69 = math.tanh %68 : vector<1x8x128xf32>
    %c5_36 = arith.constant 5 : index
    %70 = memref.load %arg6[%c5_36] : memref<32xf32, #tpu.memory_space<smem>>
    %71 = vector.broadcast %70 : f32 to vector<1x8x128xf32>
    %72 = arith.mulf %71, %69 : vector<1x8x128xf32>
    %73 = arith.addf %61, %72 : vector<1x8x128xf32>
    %c0_37 = arith.constant 0 : index
    %c0_38 = arith.constant 0 : index
    %c6 = arith.constant 6 : index
    %74 = vector.load %arg3[%c0_37, %c0_38, %c6] : memref<1x8x32xbf16, #tpu.memory_space<vmem>>, vector<1x8x1xbf16>
    %75 = arith.extf %74 : vector<1x8x1xbf16> to vector<1x8x1xf32>
    %c0_39 = arith.constant 0 : index
    %c6_40 = arith.constant 6 : index
    %c0_41 = arith.constant 0 : index
    %76 = vector.load %arg4[%c0_39, %c6_40, %c0_41] : memref<1x32x128xbf16, #tpu.memory_space<vmem>>, vector<1x1x128xbf16>
    %77 = arith.extf %76 : vector<1x1x128xbf16> to vector<1x1x128xf32>
    %78 = vector.broadcast %75 : vector<1x8x1xf32> to vector<1x8x128xf32>
    %79 = vector.broadcast %77 : vector<1x1x128xf32> to vector<1x8x128xf32>
    %80 = arith.addf %78, %79 : vector<1x8x128xf32>
    %81 = math.tanh %80 : vector<1x8x128xf32>
    %c6_42 = arith.constant 6 : index
    %82 = memref.load %arg6[%c6_42] : memref<32xf32, #tpu.memory_space<smem>>
    %83 = vector.broadcast %82 : f32 to vector<1x8x128xf32>
    %84 = arith.mulf %83, %81 : vector<1x8x128xf32>
    %85 = arith.addf %73, %84 : vector<1x8x128xf32>
    %c0_43 = arith.constant 0 : index
    %c0_44 = arith.constant 0 : index
    %c7 = arith.constant 7 : index
    %86 = vector.load %arg3[%c0_43, %c0_44, %c7] : memref<1x8x32xbf16, #tpu.memory_space<vmem>>, vector<1x8x1xbf16>
    %87 = arith.extf %86 : vector<1x8x1xbf16> to vector<1x8x1xf32>
    %c0_45 = arith.constant 0 : index
    %c7_46 = arith.constant 7 : index
    %c0_47 = arith.constant 0 : index
    %88 = vector.load %arg4[%c0_45, %c7_46, %c0_47] : memref<1x32x128xbf16, #tpu.memory_space<vmem>>, vector<1x1x128xbf16>
    %89 = arith.extf %88 : vector<1x1x128xbf16> to vector<1x1x128xf32>
    %90 = vector.broadcast %87 : vector<1x8x1xf32> to vector<1x8x128xf32>
    %91 = vector.broadcast %89 : vector<1x1x128xf32> to vector<1x8x128xf32>
    %92 = arith.addf %90, %91 : vector<1x8x128xf32>
    %93 = math.tanh %92 : vector<1x8x128xf32>
    %c7_48 = arith.constant 7 : index
    %94 = memref.load %arg6[%c7_48] : memref<32xf32, #tpu.memory_space<smem>>
    %95 = vector.broadcast %94 : f32 to vector<1x8x128xf32>
    %96 = arith.mulf %95, %93 : vector<1x8x128xf32>
    %97 = arith.addf %85, %96 : vector<1x8x128xf32>
    %c0_49 = arith.constant 0 : index
    %c0_50 = arith.constant 0 : index
    %c8 = arith.constant 8 : index
    %98 = vector.load %arg3[%c0_49, %c0_50, %c8] : memref<1x8x32xbf16, #tpu.memory_space<vmem>>, vector<1x8x1xbf16>
    %99 = arith.extf %98 : vector<1x8x1xbf16> to vector<1x8x1xf32>
    %c0_51 = arith.constant 0 : index
    %c8_52 = arith.constant 8 : index
    %c0_53 = arith.constant 0 : index
    %100 = vector.load %arg4[%c0_51, %c8_52, %c0_53] : memref<1x32x128xbf16, #tpu.memory_space<vmem>>, vector<1x1x128xbf16>
    %101 = arith.extf %100 : vector<1x1x128xbf16> to vector<1x1x128xf32>
    %102 = vector.broadcast %99 : vector<1x8x1xf32> to vector<1x8x128xf32>
    %103 = vector.broadcast %101 : vector<1x1x128xf32> to vector<1x8x128xf32>
    %104 = arith.addf %102, %103 : vector<1x8x128xf32>
    %105 = math.tanh %104 : vector<1x8x128xf32>
    %c8_54 = arith.constant 8 : index
    %106 = memref.load %arg6[%c8_54] : memref<32xf32, #tpu.memory_space<smem>>
    %107 = vector.broadcast %106 : f32 to vector<1x8x128xf32>
    %108 = arith.mulf %107, %105 : vector<1x8x128xf32>
    %109 = arith.addf %97, %108 : vector<1x8x128xf32>
    %c0_55 = arith.constant 0 : index
    %c0_56 = arith.constant 0 : index
    %c9 = arith.constant 9 : index
    %110 = vector.load %arg3[%c0_55, %c0_56, %c9] : memref<1x8x32xbf16, #tpu.memory_space<vmem>>, vector<1x8x1xbf16>
    %111 = arith.extf %110 : vector<1x8x1xbf16> to vector<1x8x1xf32>
    %c0_57 = arith.constant 0 : index
    %c9_58 = arith.constant 9 : index
    %c0_59 = arith.constant 0 : index
    %112 = vector.load %arg4[%c0_57, %c9_58, %c0_59] : memref<1x32x128xbf16, #tpu.memory_space<vmem>>, vector<1x1x128xbf16>
    %113 = arith.extf %112 : vector<1x1x128xbf16> to vector<1x1x128xf32>
    %114 = vector.broadcast %111 : vector<1x8x1xf32> to vector<1x8x128xf32>
    %115 = vector.broadcast %113 : vector<1x1x128xf32> to vector<1x8x128xf32>
    %116 = arith.addf %114, %115 : vector<1x8x128xf32>
    %117 = math.tanh %116 : vector<1x8x128xf32>
    %c9_60 = arith.constant 9 : index
    %118 = memref.load %arg6[%c9_60] : memref<32xf32, #tpu.memory_space<smem>>
    %119 = vector.broadcast %118 : f32 to vector<1x8x128xf32>
    %120 = arith.mulf %119, %117 : vector<1x8x128xf32>
    %121 = arith.addf %109, %120 : vector<1x8x128xf32>
    %c0_61 = arith.constant 0 : index
    %c0_62 = arith.constant 0 : index
    %c10 = arith.constant 10 : index
    %122 = vector.load %arg3[%c0_61, %c0_62, %c10] : memref<1x8x32xbf16, #tpu.memory_space<vmem>>, vector<1x8x1xbf16>
    %123 = arith.extf %122 : vector<1x8x1xbf16> to vector<1x8x1xf32>
    %c0_63 = arith.constant 0 : index
    %c10_64 = arith.constant 10 : index
    %c0_65 = arith.constant 0 : index
    %124 = vector.load %arg4[%c0_63, %c10_64, %c0_65] : memref<1x32x128xbf16, #tpu.memory_space<vmem>>, vector<1x1x128xbf16>
    %125 = arith.extf %124 : vector<1x1x128xbf16> to vector<1x1x128xf32>
    %126 = vector.broadcast %123 : vector<1x8x1xf32> to vector<1x8x128xf32>
    %127 = vector.broadcast %125 : vector<1x1x128xf32> to vector<1x8x128xf32>
    %128 = arith.addf %126, %127 : vector<1x8x128xf32>
    %129 = math.tanh %128 : vector<1x8x128xf32>
    %c10_66 = arith.constant 10 : index
    %130 = memref.load %arg6[%c10_66] : memref<32xf32, #tpu.memory_space<smem>>
    %131 = vector.broadcast %130 : f32 to vector<1x8x128xf32>
    %132 = arith.mulf %131, %129 : vector<1x8x128xf32>
    %133 = arith.addf %121, %132 : vector<1x8x128xf32>
    %c0_67 = arith.constant 0 : index
    %c0_68 = arith.constant 0 : index
    %c11 = arith.constant 11 : index
    %134 = vector.load %arg3[%c0_67, %c0_68, %c11] : memref<1x8x32xbf16, #tpu.memory_space<vmem>>, vector<1x8x1xbf16>
    %135 = arith.extf %134 : vector<1x8x1xbf16> to vector<1x8x1xf32>
    %c0_69 = arith.constant 0 : index
    %c11_70 = arith.constant 11 : index
    %c0_71 = arith.constant 0 : index
    %136 = vector.load %arg4[%c0_69, %c11_70, %c0_71] : memref<1x32x128xbf16, #tpu.memory_space<vmem>>, vector<1x1x128xbf16>
    %137 = arith.extf %136 : vector<1x1x128xbf16> to vector<1x1x128xf32>
    %138 = vector.broadcast %135 : vector<1x8x1xf32> to vector<1x8x128xf32>
    %139 = vector.broadcast %137 : vector<1x1x128xf32> to vector<1x8x128xf32>
    %140 = arith.addf %138, %139 : vector<1x8x128xf32>
    %141 = math.tanh %140 : vector<1x8x128xf32>
    %c11_72 = arith.constant 11 : index
    %142 = memref.load %arg6[%c11_72] : memref<32xf32, #tpu.memory_space<smem>>
    %143 = vector.broadcast %142 : f32 to vector<1x8x128xf32>
    %144 = arith.mulf %143, %141 : vector<1x8x128xf32>
    %145 = arith.addf %133, %144 : vector<1x8x128xf32>
    %c0_73 = arith.constant 0 : index
    %c0_74 = arith.constant 0 : index
    %c12 = arith.constant 12 : index
    %146 = vector.load %arg3[%c0_73, %c0_74, %c12] : memref<1x8x32xbf16, #tpu.memory_space<vmem>>, vector<1x8x1xbf16>
    %147 = arith.extf %146 : vector<1x8x1xbf16> to vector<1x8x1xf32>
    %c0_75 = arith.constant 0 : index
    %c12_76 = arith.constant 12 : index
    %c0_77 = arith.constant 0 : index
    %148 = vector.load %arg4[%c0_75, %c12_76, %c0_77] : memref<1x32x128xbf16, #tpu.memory_space<vmem>>, vector<1x1x128xbf16>
    %149 = arith.extf %148 : vector<1x1x128xbf16> to vector<1x1x128xf32>
    %150 = vector.broadcast %147 : vector<1x8x1xf32> to vector<1x8x128xf32>
    %151 = vector.broadcast %149 : vector<1x1x128xf32> to vector<1x8x128xf32>
    %152 = arith.addf %150, %151 : vector<1x8x128xf32>
    %153 = math.tanh %152 : vector<1x8x128xf32>
    %c12_78 = arith.constant 12 : index
    %154 = memref.load %arg6[%c12_78] : memref<32xf32, #tpu.memory_space<smem>>
    %155 = vector.broadcast %154 : f32 to vector<1x8x128xf32>
    %156 = arith.mulf %155, %153 : vector<1x8x128xf32>
    %157 = arith.addf %145, %156 : vector<1x8x128xf32>
    %c0_79 = arith.constant 0 : index
    %c0_80 = arith.constant 0 : index
    %c13 = arith.constant 13 : index
    %158 = vector.load %arg3[%c0_79, %c0_80, %c13] : memref<1x8x32xbf16, #tpu.memory_space<vmem>>, vector<1x8x1xbf16>
    %159 = arith.extf %158 : vector<1x8x1xbf16> to vector<1x8x1xf32>
    %c0_81 = arith.constant 0 : index
    %c13_82 = arith.constant 13 : index
    %c0_83 = arith.constant 0 : index
    %160 = vector.load %arg4[%c0_81, %c13_82, %c0_83] : memref<1x32x128xbf16, #tpu.memory_space<vmem>>, vector<1x1x128xbf16>
    %161 = arith.extf %160 : vector<1x1x128xbf16> to vector<1x1x128xf32>
    %162 = vector.broadcast %159 : vector<1x8x1xf32> to vector<1x8x128xf32>
    %163 = vector.broadcast %161 : vector<1x1x128xf32> to vector<1x8x128xf32>
    %164 = arith.addf %162, %163 : vector<1x8x128xf32>
    %165 = math.tanh %164 : vector<1x8x128xf32>
    %c13_84 = arith.constant 13 : index
    %166 = memref.load %arg6[%c13_84] : memref<32xf32, #tpu.memory_space<smem>>
    %167 = vector.broadcast %166 : f32 to vector<1x8x128xf32>
    %168 = arith.mulf %167, %165 : vector<1x8x128xf32>
    %169 = arith.addf %157, %168 : vector<1x8x128xf32>
    %c0_85 = arith.constant 0 : index
    %c0_86 = arith.constant 0 : index
    %c14 = arith.constant 14 : index
    %170 = vector.load %arg3[%c0_85, %c0_86, %c14] : memref<1x8x32xbf16, #tpu.memory_space<vmem>>, vector<1x8x1xbf16>
    %171 = arith.extf %170 : vector<1x8x1xbf16> to vector<1x8x1xf32>
    %c0_87 = arith.constant 0 : index
    %c14_88 = arith.constant 14 : index
    %c0_89 = arith.constant 0 : index
    %172 = vector.load %arg4[%c0_87, %c14_88, %c0_89] : memref<1x32x128xbf16, #tpu.memory_space<vmem>>, vector<1x1x128xbf16>
    %173 = arith.extf %172 : vector<1x1x128xbf16> to vector<1x1x128xf32>
    %174 = vector.broadcast %171 : vector<1x8x1xf32> to vector<1x8x128xf32>
    %175 = vector.broadcast %173 : vector<1x1x128xf32> to vector<1x8x128xf32>
    %176 = arith.addf %174, %175 : vector<1x8x128xf32>
    %177 = math.tanh %176 : vector<1x8x128xf32>
    %c14_90 = arith.constant 14 : index
    %178 = memref.load %arg6[%c14_90] : memref<32xf32, #tpu.memory_space<smem>>
    %179 = vector.broadcast %178 : f32 to vector<1x8x128xf32>
    %180 = arith.mulf %179, %177 : vector<1x8x128xf32>
    %181 = arith.addf %169, %180 : vector<1x8x128xf32>
    %c0_91 = arith.constant 0 : index
    %c0_92 = arith.constant 0 : index
    %c15 = arith.constant 15 : index
    %182 = vector.load %arg3[%c0_91, %c0_92, %c15] : memref<1x8x32xbf16, #tpu.memory_space<vmem>>, vector<1x8x1xbf16>
    %183 = arith.extf %182 : vector<1x8x1xbf16> to vector<1x8x1xf32>
    %c0_93 = arith.constant 0 : index
    %c15_94 = arith.constant 15 : index
    %c0_95 = arith.constant 0 : index
    %184 = vector.load %arg4[%c0_93, %c15_94, %c0_95] : memref<1x32x128xbf16, #tpu.memory_space<vmem>>, vector<1x1x128xbf16>
    %185 = arith.extf %184 : vector<1x1x128xbf16> to vector<1x1x128xf32>
    %186 = vector.broadcast %183 : vector<1x8x1xf32> to vector<1x8x128xf32>
    %187 = vector.broadcast %185 : vector<1x1x128xf32> to vector<1x8x128xf32>
    %188 = arith.addf %186, %187 : vector<1x8x128xf32>
    %189 = math.tanh %188 : vector<1x8x128xf32>
    %c15_96 = arith.constant 15 : index
    %190 = memref.load %arg6[%c15_96] : memref<32xf32, #tpu.memory_space<smem>>
    %191 = vector.broadcast %190 : f32 to vector<1x8x128xf32>
    %192 = arith.mulf %191, %189 : vector<1x8x128xf32>
    %193 = arith.addf %181, %192 : vector<1x8x128xf32>
    %c0_97 = arith.constant 0 : index
    %c0_98 = arith.constant 0 : index
    %c16 = arith.constant 16 : index
    %194 = vector.load %arg3[%c0_97, %c0_98, %c16] : memref<1x8x32xbf16, #tpu.memory_space<vmem>>, vector<1x8x1xbf16>
    %195 = arith.extf %194 : vector<1x8x1xbf16> to vector<1x8x1xf32>
    %c0_99 = arith.constant 0 : index
    %c16_100 = arith.constant 16 : index
    %c0_101 = arith.constant 0 : index
    %196 = vector.load %arg4[%c0_99, %c16_100, %c0_101] : memref<1x32x128xbf16, #tpu.memory_space<vmem>>, vector<1x1x128xbf16>
    %197 = arith.extf %196 : vector<1x1x128xbf16> to vector<1x1x128xf32>
    %198 = vector.broadcast %195 : vector<1x8x1xf32> to vector<1x8x128xf32>
    %199 = vector.broadcast %197 : vector<1x1x128xf32> to vector<1x8x128xf32>
    %200 = arith.addf %198, %199 : vector<1x8x128xf32>
    %201 = math.tanh %200 : vector<1x8x128xf32>
    %c16_102 = arith.constant 16 : index
    %202 = memref.load %arg6[%c16_102] : memref<32xf32, #tpu.memory_space<smem>>
    %203 = vector.broadcast %202 : f32 to vector<1x8x128xf32>
    %204 = arith.mulf %203, %201 : vector<1x8x128xf32>
    %205 = arith.addf %193, %204 : vector<1x8x128xf32>
    %c0_103 = arith.constant 0 : index
    %c0_104 = arith.constant 0 : index
    %c17 = arith.constant 17 : index
    %206 = vector.load %arg3[%c0_103, %c0_104, %c17] : memref<1x8x32xbf16, #tpu.memory_space<vmem>>, vector<1x8x1xbf16>
    %207 = arith.extf %206 : vector<1x8x1xbf16> to vector<1x8x1xf32>
    %c0_105 = arith.constant 0 : index
    %c17_106 = arith.constant 17 : index
    %c0_107 = arith.constant 0 : index
    %208 = vector.load %arg4[%c0_105, %c17_106, %c0_107] : memref<1x32x128xbf16, #tpu.memory_space<vmem>>, vector<1x1x128xbf16>
    %209 = arith.extf %208 : vector<1x1x128xbf16> to vector<1x1x128xf32>
    %210 = vector.broadcast %207 : vector<1x8x1xf32> to vector<1x8x128xf32>
    %211 = vector.broadcast %209 : vector<1x1x128xf32> to vector<1x8x128xf32>
    %212 = arith.addf %210, %211 : vector<1x8x128xf32>
    %213 = math.tanh %212 : vector<1x8x128xf32>
    %c17_108 = arith.constant 17 : index
    %214 = memref.load %arg6[%c17_108] : memref<32xf32, #tpu.memory_space<smem>>
    %215 = vector.broadcast %214 : f32 to vector<1x8x128xf32>
    %216 = arith.mulf %215, %213 : vector<1x8x128xf32>
    %217 = arith.addf %205, %216 : vector<1x8x128xf32>
    %c0_109 = arith.constant 0 : index
    %c0_110 = arith.constant 0 : index
    %c18 = arith.constant 18 : index
    %218 = vector.load %arg3[%c0_109, %c0_110, %c18] : memref<1x8x32xbf16, #tpu.memory_space<vmem>>, vector<1x8x1xbf16>
    %219 = arith.extf %218 : vector<1x8x1xbf16> to vector<1x8x1xf32>
    %c0_111 = arith.constant 0 : index
    %c18_112 = arith.constant 18 : index
    %c0_113 = arith.constant 0 : index
    %220 = vector.load %arg4[%c0_111, %c18_112, %c0_113] : memref<1x32x128xbf16, #tpu.memory_space<vmem>>, vector<1x1x128xbf16>
    %221 = arith.extf %220 : vector<1x1x128xbf16> to vector<1x1x128xf32>
    %222 = vector.broadcast %219 : vector<1x8x1xf32> to vector<1x8x128xf32>
    %223 = vector.broadcast %221 : vector<1x1x128xf32> to vector<1x8x128xf32>
    %224 = arith.addf %222, %223 : vector<1x8x128xf32>
    %225 = math.tanh %224 : vector<1x8x128xf32>
    %c18_114 = arith.constant 18 : index
    %226 = memref.load %arg6[%c18_114] : memref<32xf32, #tpu.memory_space<smem>>
    %227 = vector.broadcast %226 : f32 to vector<1x8x128xf32>
    %228 = arith.mulf %227, %225 : vector<1x8x128xf32>
    %229 = arith.addf %217, %228 : vector<1x8x128xf32>
    %c0_115 = arith.constant 0 : index
    %c0_116 = arith.constant 0 : index
    %c19 = arith.constant 19 : index
    %230 = vector.load %arg3[%c0_115, %c0_116, %c19] : memref<1x8x32xbf16, #tpu.memory_space<vmem>>, vector<1x8x1xbf16>
    %231 = arith.extf %230 : vector<1x8x1xbf16> to vector<1x8x1xf32>
    %c0_117 = arith.constant 0 : index
    %c19_118 = arith.constant 19 : index
    %c0_119 = arith.constant 0 : index
    %232 = vector.load %arg4[%c0_117, %c19_118, %c0_119] : memref<1x32x128xbf16, #tpu.memory_space<vmem>>, vector<1x1x128xbf16>
    %233 = arith.extf %232 : vector<1x1x128xbf16> to vector<1x1x128xf32>
    %234 = vector.broadcast %231 : vector<1x8x1xf32> to vector<1x8x128xf32>
    %235 = vector.broadcast %233 : vector<1x1x128xf32> to vector<1x8x128xf32>
    %236 = arith.addf %234, %235 : vector<1x8x128xf32>
    %237 = math.tanh %236 : vector<1x8x128xf32>
    %c19_120 = arith.constant 19 : index
    %238 = memref.load %arg6[%c19_120] : memref<32xf32, #tpu.memory_space<smem>>
    %239 = vector.broadcast %238 : f32 to vector<1x8x128xf32>
    %240 = arith.mulf %239, %237 : vector<1x8x128xf32>
    %241 = arith.addf %229, %240 : vector<1x8x128xf32>
    %c0_121 = arith.constant 0 : index
    %c0_122 = arith.constant 0 : index
    %c20 = arith.constant 20 : index
    %242 = vector.load %arg3[%c0_121, %c0_122, %c20] : memref<1x8x32xbf16, #tpu.memory_space<vmem>>, vector<1x8x1xbf16>
    %243 = arith.extf %242 : vector<1x8x1xbf16> to vector<1x8x1xf32>
    %c0_123 = arith.constant 0 : index
    %c20_124 = arith.constant 20 : index
    %c0_125 = arith.constant 0 : index
    %244 = vector.load %arg4[%c0_123, %c20_124, %c0_125] : memref<1x32x128xbf16, #tpu.memory_space<vmem>>, vector<1x1x128xbf16>
    %245 = arith.extf %244 : vector<1x1x128xbf16> to vector<1x1x128xf32>
    %246 = vector.broadcast %243 : vector<1x8x1xf32> to vector<1x8x128xf32>
    %247 = vector.broadcast %245 : vector<1x1x128xf32> to vector<1x8x128xf32>
    %248 = arith.addf %246, %247 : vector<1x8x128xf32>
    %249 = math.tanh %248 : vector<1x8x128xf32>
    %c20_126 = arith.constant 20 : index
    %250 = memref.load %arg6[%c20_126] : memref<32xf32, #tpu.memory_space<smem>>
    %251 = vector.broadcast %250 : f32 to vector<1x8x128xf32>
    %252 = arith.mulf %251, %249 : vector<1x8x128xf32>
    %253 = arith.addf %241, %252 : vector<1x8x128xf32>
    %c0_127 = arith.constant 0 : index
    %c0_128 = arith.constant 0 : index
    %c21 = arith.constant 21 : index
    %254 = vector.load %arg3[%c0_127, %c0_128, %c21] : memref<1x8x32xbf16, #tpu.memory_space<vmem>>, vector<1x8x1xbf16>
    %255 = arith.extf %254 : vector<1x8x1xbf16> to vector<1x8x1xf32>
    %c0_129 = arith.constant 0 : index
    %c21_130 = arith.constant 21 : index
    %c0_131 = arith.constant 0 : index
    %256 = vector.load %arg4[%c0_129, %c21_130, %c0_131] : memref<1x32x128xbf16, #tpu.memory_space<vmem>>, vector<1x1x128xbf16>
    %257 = arith.extf %256 : vector<1x1x128xbf16> to vector<1x1x128xf32>
    %258 = vector.broadcast %255 : vector<1x8x1xf32> to vector<1x8x128xf32>
    %259 = vector.broadcast %257 : vector<1x1x128xf32> to vector<1x8x128xf32>
    %260 = arith.addf %258, %259 : vector<1x8x128xf32>
    %261 = math.tanh %260 : vector<1x8x128xf32>
    %c21_132 = arith.constant 21 : index
    %262 = memref.load %arg6[%c21_132] : memref<32xf32, #tpu.memory_space<smem>>
    %263 = vector.broadcast %262 : f32 to vector<1x8x128xf32>
    %264 = arith.mulf %263, %261 : vector<1x8x128xf32>
    %265 = arith.addf %253, %264 : vector<1x8x128xf32>
    %c0_133 = arith.constant 0 : index
    %c0_134 = arith.constant 0 : index
    %c22 = arith.constant 22 : index
    %266 = vector.load %arg3[%c0_133, %c0_134, %c22] : memref<1x8x32xbf16, #tpu.memory_space<vmem>>, vector<1x8x1xbf16>
    %267 = arith.extf %266 : vector<1x8x1xbf16> to vector<1x8x1xf32>
    %c0_135 = arith.constant 0 : index
    %c22_136 = arith.constant 22 : index
    %c0_137 = arith.constant 0 : index
    %268 = vector.load %arg4[%c0_135, %c22_136, %c0_137] : memref<1x32x128xbf16, #tpu.memory_space<vmem>>, vector<1x1x128xbf16>
    %269 = arith.extf %268 : vector<1x1x128xbf16> to vector<1x1x128xf32>
    %270 = vector.broadcast %267 : vector<1x8x1xf32> to vector<1x8x128xf32>
    %271 = vector.broadcast %269 : vector<1x1x128xf32> to vector<1x8x128xf32>
    %272 = arith.addf %270, %271 : vector<1x8x128xf32>
    %273 = math.tanh %272 : vector<1x8x128xf32>
    %c22_138 = arith.constant 22 : index
    %274 = memref.load %arg6[%c22_138] : memref<32xf32, #tpu.memory_space<smem>>
    %275 = vector.broadcast %274 : f32 to vector<1x8x128xf32>
    %276 = arith.mulf %275, %273 : vector<1x8x128xf32>
    %277 = arith.addf %265, %276 : vector<1x8x128xf32>
    %c0_139 = arith.constant 0 : index
    %c0_140 = arith.constant 0 : index
    %c23 = arith.constant 23 : index
    %278 = vector.load %arg3[%c0_139, %c0_140, %c23] : memref<1x8x32xbf16, #tpu.memory_space<vmem>>, vector<1x8x1xbf16>
    %279 = arith.extf %278 : vector<1x8x1xbf16> to vector<1x8x1xf32>
    %c0_141 = arith.constant 0 : index
    %c23_142 = arith.constant 23 : index
    %c0_143 = arith.constant 0 : index
    %280 = vector.load %arg4[%c0_141, %c23_142, %c0_143] : memref<1x32x128xbf16, #tpu.memory_space<vmem>>, vector<1x1x128xbf16>
    %281 = arith.extf %280 : vector<1x1x128xbf16> to vector<1x1x128xf32>
    %282 = vector.broadcast %279 : vector<1x8x1xf32> to vector<1x8x128xf32>
    %283 = vector.broadcast %281 : vector<1x1x128xf32> to vector<1x8x128xf32>
    %284 = arith.addf %282, %283 : vector<1x8x128xf32>
    %285 = math.tanh %284 : vector<1x8x128xf32>
    %c23_144 = arith.constant 23 : index
    %286 = memref.load %arg6[%c23_144] : memref<32xf32, #tpu.memory_space<smem>>
    %287 = vector.broadcast %286 : f32 to vector<1x8x128xf32>
    %288 = arith.mulf %287, %285 : vector<1x8x128xf32>
    %289 = arith.addf %277, %288 : vector<1x8x128xf32>
    %c0_145 = arith.constant 0 : index
    %c0_146 = arith.constant 0 : index
    %c24 = arith.constant 24 : index
    %290 = vector.load %arg3[%c0_145, %c0_146, %c24] : memref<1x8x32xbf16, #tpu.memory_space<vmem>>, vector<1x8x1xbf16>
    %291 = arith.extf %290 : vector<1x8x1xbf16> to vector<1x8x1xf32>
    %c0_147 = arith.constant 0 : index
    %c24_148 = arith.constant 24 : index
    %c0_149 = arith.constant 0 : index
    %292 = vector.load %arg4[%c0_147, %c24_148, %c0_149] : memref<1x32x128xbf16, #tpu.memory_space<vmem>>, vector<1x1x128xbf16>
    %293 = arith.extf %292 : vector<1x1x128xbf16> to vector<1x1x128xf32>
    %294 = vector.broadcast %291 : vector<1x8x1xf32> to vector<1x8x128xf32>
    %295 = vector.broadcast %293 : vector<1x1x128xf32> to vector<1x8x128xf32>
    %296 = arith.addf %294, %295 : vector<1x8x128xf32>
    %297 = math.tanh %296 : vector<1x8x128xf32>
    %c24_150 = arith.constant 24 : index
    %298 = memref.load %arg6[%c24_150] : memref<32xf32, #tpu.memory_space<smem>>
    %299 = vector.broadcast %298 : f32 to vector<1x8x128xf32>
    %300 = arith.mulf %299, %297 : vector<1x8x128xf32>
    %301 = arith.addf %289, %300 : vector<1x8x128xf32>
    %c0_151 = arith.constant 0 : index
    %c0_152 = arith.constant 0 : index
    %c25 = arith.constant 25 : index
    %302 = vector.load %arg3[%c0_151, %c0_152, %c25] : memref<1x8x32xbf16, #tpu.memory_space<vmem>>, vector<1x8x1xbf16>
    %303 = arith.extf %302 : vector<1x8x1xbf16> to vector<1x8x1xf32>
    %c0_153 = arith.constant 0 : index
    %c25_154 = arith.constant 25 : index
    %c0_155 = arith.constant 0 : index
    %304 = vector.load %arg4[%c0_153, %c25_154, %c0_155] : memref<1x32x128xbf16, #tpu.memory_space<vmem>>, vector<1x1x128xbf16>
    %305 = arith.extf %304 : vector<1x1x128xbf16> to vector<1x1x128xf32>
    %306 = vector.broadcast %303 : vector<1x8x1xf32> to vector<1x8x128xf32>
    %307 = vector.broadcast %305 : vector<1x1x128xf32> to vector<1x8x128xf32>
    %308 = arith.addf %306, %307 : vector<1x8x128xf32>
    %309 = math.tanh %308 : vector<1x8x128xf32>
    %c25_156 = arith.constant 25 : index
    %310 = memref.load %arg6[%c25_156] : memref<32xf32, #tpu.memory_space<smem>>
    %311 = vector.broadcast %310 : f32 to vector<1x8x128xf32>
    %312 = arith.mulf %311, %309 : vector<1x8x128xf32>
    %313 = arith.addf %301, %312 : vector<1x8x128xf32>
    %c0_157 = arith.constant 0 : index
    %c0_158 = arith.constant 0 : index
    %c26 = arith.constant 26 : index
    %314 = vector.load %arg3[%c0_157, %c0_158, %c26] : memref<1x8x32xbf16, #tpu.memory_space<vmem>>, vector<1x8x1xbf16>
    %315 = arith.extf %314 : vector<1x8x1xbf16> to vector<1x8x1xf32>
    %c0_159 = arith.constant 0 : index
    %c26_160 = arith.constant 26 : index
    %c0_161 = arith.constant 0 : index
    %316 = vector.load %arg4[%c0_159, %c26_160, %c0_161] : memref<1x32x128xbf16, #tpu.memory_space<vmem>>, vector<1x1x128xbf16>
    %317 = arith.extf %316 : vector<1x1x128xbf16> to vector<1x1x128xf32>
    %318 = vector.broadcast %315 : vector<1x8x1xf32> to vector<1x8x128xf32>
    %319 = vector.broadcast %317 : vector<1x1x128xf32> to vector<1x8x128xf32>
    %320 = arith.addf %318, %319 : vector<1x8x128xf32>
    %321 = math.tanh %320 : vector<1x8x128xf32>
    %c26_162 = arith.constant 26 : index
    %322 = memref.load %arg6[%c26_162] : memref<32xf32, #tpu.memory_space<smem>>
    %323 = vector.broadcast %322 : f32 to vector<1x8x128xf32>
    %324 = arith.mulf %323, %321 : vector<1x8x128xf32>
    %325 = arith.addf %313, %324 : vector<1x8x128xf32>
    %c0_163 = arith.constant 0 : index
    %c0_164 = arith.constant 0 : index
    %c27 = arith.constant 27 : index
    %326 = vector.load %arg3[%c0_163, %c0_164, %c27] : memref<1x8x32xbf16, #tpu.memory_space<vmem>>, vector<1x8x1xbf16>
    %327 = arith.extf %326 : vector<1x8x1xbf16> to vector<1x8x1xf32>
    %c0_165 = arith.constant 0 : index
    %c27_166 = arith.constant 27 : index
    %c0_167 = arith.constant 0 : index
    %328 = vector.load %arg4[%c0_165, %c27_166, %c0_167] : memref<1x32x128xbf16, #tpu.memory_space<vmem>>, vector<1x1x128xbf16>
    %329 = arith.extf %328 : vector<1x1x128xbf16> to vector<1x1x128xf32>
    %330 = vector.broadcast %327 : vector<1x8x1xf32> to vector<1x8x128xf32>
    %331 = vector.broadcast %329 : vector<1x1x128xf32> to vector<1x8x128xf32>
    %332 = arith.addf %330, %331 : vector<1x8x128xf32>
    %333 = math.tanh %332 : vector<1x8x128xf32>
    %c27_168 = arith.constant 27 : index
    %334 = memref.load %arg6[%c27_168] : memref<32xf32, #tpu.memory_space<smem>>
    %335 = vector.broadcast %334 : f32 to vector<1x8x128xf32>
    %336 = arith.mulf %335, %333 : vector<1x8x128xf32>
    %337 = arith.addf %325, %336 : vector<1x8x128xf32>
    %c0_169 = arith.constant 0 : index
    %c0_170 = arith.constant 0 : index
    %c28 = arith.constant 28 : index
    %338 = vector.load %arg3[%c0_169, %c0_170, %c28] : memref<1x8x32xbf16, #tpu.memory_space<vmem>>, vector<1x8x1xbf16>
    %339 = arith.extf %338 : vector<1x8x1xbf16> to vector<1x8x1xf32>
    %c0_171 = arith.constant 0 : index
    %c28_172 = arith.constant 28 : index
    %c0_173 = arith.constant 0 : index
    %340 = vector.load %arg4[%c0_171, %c28_172, %c0_173] : memref<1x32x128xbf16, #tpu.memory_space<vmem>>, vector<1x1x128xbf16>
    %341 = arith.extf %340 : vector<1x1x128xbf16> to vector<1x1x128xf32>
    %342 = vector.broadcast %339 : vector<1x8x1xf32> to vector<1x8x128xf32>
    %343 = vector.broadcast %341 : vector<1x1x128xf32> to vector<1x8x128xf32>
    %344 = arith.addf %342, %343 : vector<1x8x128xf32>
    %345 = math.tanh %344 : vector<1x8x128xf32>
    %c28_174 = arith.constant 28 : index
    %346 = memref.load %arg6[%c28_174] : memref<32xf32, #tpu.memory_space<smem>>
    %347 = vector.broadcast %346 : f32 to vector<1x8x128xf32>
    %348 = arith.mulf %347, %345 : vector<1x8x128xf32>
    %349 = arith.addf %337, %348 : vector<1x8x128xf32>
    %c0_175 = arith.constant 0 : index
    %c0_176 = arith.constant 0 : index
    %c29 = arith.constant 29 : index
    %350 = vector.load %arg3[%c0_175, %c0_176, %c29] : memref<1x8x32xbf16, #tpu.memory_space<vmem>>, vector<1x8x1xbf16>
    %351 = arith.extf %350 : vector<1x8x1xbf16> to vector<1x8x1xf32>
    %c0_177 = arith.constant 0 : index
    %c29_178 = arith.constant 29 : index
    %c0_179 = arith.constant 0 : index
    %352 = vector.load %arg4[%c0_177, %c29_178, %c0_179] : memref<1x32x128xbf16, #tpu.memory_space<vmem>>, vector<1x1x128xbf16>
    %353 = arith.extf %352 : vector<1x1x128xbf16> to vector<1x1x128xf32>
    %354 = vector.broadcast %351 : vector<1x8x1xf32> to vector<1x8x128xf32>
    %355 = vector.broadcast %353 : vector<1x1x128xf32> to vector<1x8x128xf32>
    %356 = arith.addf %354, %355 : vector<1x8x128xf32>
    %357 = math.tanh %356 : vector<1x8x128xf32>
    %c29_180 = arith.constant 29 : index
    %358 = memref.load %arg6[%c29_180] : memref<32xf32, #tpu.memory_space<smem>>
    %359 = vector.broadcast %358 : f32 to vector<1x8x128xf32>
    %360 = arith.mulf %359, %357 : vector<1x8x128xf32>
    %361 = arith.addf %349, %360 : vector<1x8x128xf32>
    %c0_181 = arith.constant 0 : index
    %c0_182 = arith.constant 0 : index
    %c30 = arith.constant 30 : index
    %362 = vector.load %arg3[%c0_181, %c0_182, %c30] : memref<1x8x32xbf16, #tpu.memory_space<vmem>>, vector<1x8x1xbf16>
    %363 = arith.extf %362 : vector<1x8x1xbf16> to vector<1x8x1xf32>
    %c0_183 = arith.constant 0 : index
    %c30_184 = arith.constant 30 : index
    %c0_185 = arith.constant 0 : index
    %364 = vector.load %arg4[%c0_183, %c30_184, %c0_185] : memref<1x32x128xbf16, #tpu.memory_space<vmem>>, vector<1x1x128xbf16>
    %365 = arith.extf %364 : vector<1x1x128xbf16> to vector<1x1x128xf32>
    %366 = vector.broadcast %363 : vector<1x8x1xf32> to vector<1x8x128xf32>
    %367 = vector.broadcast %365 : vector<1x1x128xf32> to vector<1x8x128xf32>
    %368 = arith.addf %366, %367 : vector<1x8x128xf32>
    %369 = math.tanh %368 : vector<1x8x128xf32>
    %c30_186 = arith.constant 30 : index
    %370 = memref.load %arg6[%c30_186] : memref<32xf32, #tpu.memory_space<smem>>
    %371 = vector.broadcast %370 : f32 to vector<1x8x128xf32>
    %372 = arith.mulf %371, %369 : vector<1x8x128xf32>
    %373 = arith.addf %361, %372 : vector<1x8x128xf32>
    %c0_187 = arith.constant 0 : index
    %c0_188 = arith.constant 0 : index
    %c31 = arith.constant 31 : index
    %374 = vector.load %arg3[%c0_187, %c0_188, %c31] : memref<1x8x32xbf16, #tpu.memory_space<vmem>>, vector<1x8x1xbf16>
    %375 = arith.extf %374 : vector<1x8x1xbf16> to vector<1x8x1xf32>
    %c0_189 = arith.constant 0 : index
    %c31_190 = arith.constant 31 : index
    %c0_191 = arith.constant 0 : index
    %376 = vector.load %arg4[%c0_189, %c31_190, %c0_191] : memref<1x32x128xbf16, #tpu.memory_space<vmem>>, vector<1x1x128xbf16>
    %377 = arith.extf %376 : vector<1x1x128xbf16> to vector<1x1x128xf32>
    %378 = vector.broadcast %375 : vector<1x8x1xf32> to vector<1x8x128xf32>
    %379 = vector.broadcast %377 : vector<1x1x128xf32> to vector<1x8x128xf32>
    %380 = arith.addf %378, %379 : vector<1x8x128xf32>
    %381 = math.tanh %380 : vector<1x8x128xf32>
    %c31_192 = arith.constant 31 : index
    %382 = memref.load %arg6[%c31_192] : memref<32xf32, #tpu.memory_space<smem>>
    %383 = vector.broadcast %382 : f32 to vector<1x8x128xf32>
    %384 = arith.mulf %383, %381 : vector<1x8x128xf32>
    %385 = arith.addf %373, %384 : vector<1x8x128xf32>
    %386 = tpu.iota {dimensions = array<i32: 2>} : vector<1x8x128xi32>
    %c128_i32 = arith.constant 128 : i32
    %387 = arith.muli %arg2, %c128_i32 : i32
    %388 = vector.broadcast %387 : i32 to vector<1x8x128xi32>
    %389 = arith.addi %386, %388 : vector<1x8x128xi32>
    %c8_i32 = arith.constant 8 : i32
    %390 = vector.broadcast %c8_i32 : i32 to vector<1x8x128xi32>
    %391 = arith.cmpi slt, %389, %390 : vector<1x8x128xi32>
    %cst = arith.constant -1.000000e+30 : f32
    %392 = vector.broadcast %cst : f32 to vector<1x8x128xf32>
    %393 = arith.select %391, %385, %392 : vector<1x8x128xi1>, vector<1x8x128xf32>
    %c0_193 = arith.constant 0 : index
    %c0_194 = arith.constant 0 : index
    %c0_195 = arith.constant 0 : index
    %394 = vector.load %arg8[%c0_193, %c0_194, %c0_195] : memref<1x8x1xf32, #tpu.memory_space<vmem>>, vector<1x8x1xf32>
    %cst_196 = arith.constant dense<0xFF800000> : vector<1x8xf32>
    %395 = vector.multi_reduction <maximumf>, %393, %cst_196 [2] : vector<1x8x128xf32> to vector<1x8xf32>
    %396 = vector.shape_cast %395 : vector<1x8xf32> to vector<1x8x1xf32>
    %397 = arith.maximumf %394, %396 : vector<1x8x1xf32>
    %398 = arith.subf %394, %397 : vector<1x8x1xf32>
    %399 = math.exp %398 : vector<1x8x1xf32>
    %400 = vector.broadcast %397 : vector<1x8x1xf32> to vector<1x8x128xf32>
    %401 = arith.subf %393, %400 : vector<1x8x128xf32>
    %402 = math.exp %401 : vector<1x8x128xf32>
    %c0_197 = arith.constant 0 : index
    %c0_198 = arith.constant 0 : index
    %c0_199 = arith.constant 0 : index
    %403 = vector.load %arg9[%c0_197, %c0_198, %c0_199] : memref<1x8x1xf32, #tpu.memory_space<vmem>>, vector<1x8x1xf32>
    %404 = arith.mulf %399, %403 : vector<1x8x1xf32>
    %cst_200 = arith.constant dense<0.000000e+00> : vector<1x8xf32>
    %405 = vector.multi_reduction <add>, %402, %cst_200 [2] : vector<1x8x128xf32> to vector<1x8xf32>
    %406 = vector.shape_cast %405 : vector<1x8xf32> to vector<1x8x1xf32>
    %407 = arith.addf %404, %406 : vector<1x8x1xf32>
    %c0_201 = arith.constant 0 : index
    %c0_202 = arith.constant 0 : index
    %c0_203 = arith.constant 0 : index
    %408 = vector.load %arg9[%c0_201, %c0_202, %c0_203] : memref<1x8x1xf32, #tpu.memory_space<vmem>>, vector<1x8x1xf32>
    tpu.vector_store %arg9[%c0_201, %c0_202, %c0_203], %407 {strides = array<i32>} : memref<1x8x1xf32, #tpu.memory_space<vmem>>, vector<1x8x1xf32>,
    %c0_204 = arith.constant 0 : index
    %c0_205 = arith.constant 0 : index
    %c0_206 = arith.constant 0 : index
    %409 = vector.load %arg10[%c0_204, %c0_205, %c0_206] : memref<1x8x16xf32, #tpu.memory_space<vmem>>, vector<1x8x16xf32>
    %410 = vector.broadcast %399 : vector<1x8x1xf32> to vector<1x8x16xf32>
    %411 = arith.mulf %410, %409 : vector<1x8x16xf32>
    %412 = arith.truncf %402 : vector<1x8x128xf32> to vector<1x8x128xbf16>
    %c0_207 = arith.constant 0 : index
    %c0_208 = arith.constant 0 : index
    %c0_209 = arith.constant 0 : index
    %413 = vector.load %arg5[%c0_207, %c0_208, %c0_209] : memref<1x128x16xbf16, #tpu.memory_space<vmem>>, vector<1x128x16xbf16>
    "tpu.trace_start"() <{level = 10 : i32, message = "bqk,bkd->bqd"}> : () -> ()
    %cst_210 = arith.constant dense<0.000000e+00> : vector<1x8x16xf32>
    %414 = tpu.matmul %412, %413, %cst_210 {dimension_numbers = #tpu.dot_dimension_numbers<[2], [1], [1], [2], [0, 0, 0, 1, 1, 2], [0], [0]>} : vector<1x8x128xbf16>, vector<1x128x16xbf16>, vector<1x8x16xf32> -> vector<1x8x16xf32>
    "tpu.trace_stop"() : () -> ()
    %415 = arith.addf %411, %414 : vector<1x8x16xf32>
    %c0_211 = arith.constant 0 : index
    %c0_212 = arith.constant 0 : index
    %c0_213 = arith.constant 0 : index
    %416 = vector.load %arg10[%c0_211, %c0_212, %c0_213] : memref<1x8x16xf32, #tpu.memory_space<vmem>>, vector<1x8x16xf32>
    tpu.vector_store %arg10[%c0_211, %c0_212, %c0_213], %415 {strides = array<i32>} : memref<1x8x16xf32, #tpu.memory_space<vmem>>, vector<1x8x16xf32>,
    %c0_214 = arith.constant 0 : index
    %c0_215 = arith.constant 0 : index
    %c0_216 = arith.constant 0 : index
    %417 = vector.load %arg8[%c0_214, %c0_215, %c0_216] : memref<1x8x1xf32, #tpu.memory_space<vmem>>, vector<1x8x1xf32>
    tpu.vector_store %arg8[%c0_214, %c0_215, %c0_216], %397 {strides = array<i32>} : memref<1x8x1xf32, #tpu.memory_space<vmem>>, vector<1x8x1xf32>,
    %c0_i32_217 = arith.constant 0 : i32
    %418 = arith.cmpi eq, %arg2, %c0_i32_217 : i32
    %419 = arith.extui %418 : i1 to i32
    %c0_i32_218 = arith.constant 0 : i32
    %420 = arith.cmpi ne, %419, %c0_i32_218 : i32
    scf.if %420 {
      %c0_219 = arith.constant 0 : index
      %c0_220 = arith.constant 0 : index
      %c0_221 = arith.constant 0 : index
      %421 = vector.load %arg9[%c0_219, %c0_220, %c0_221] : memref<1x8x1xf32, #tpu.memory_space<vmem>>, vector<1x8x1xf32>
      %422 = tpu.reciprocal %421 {approx = true} : vector<1x8x1xf32> -> vector<1x8x1xf32>
      %c0_222 = arith.constant 0 : index
      %c0_223 = arith.constant 0 : index
      %c0_224 = arith.constant 0 : index
      %423 = vector.load %arg10[%c0_222, %c0_223, %c0_224] : memref<1x8x16xf32, #tpu.memory_space<vmem>>, vector<1x8x16xf32>
      %424 = vector.broadcast %422 : vector<1x8x1xf32> to vector<1x8x16xf32>
      %425 = arith.mulf %423, %424 : vector<1x8x16xf32>
      %c0_225 = arith.constant 0 : index
      %c0_226 = arith.constant 0 : index
      %c0_227 = arith.constant 0 : index
      %426 = vector.load %arg7[%c0_225, %c0_226, %c0_227] : memref<1x8x16xf32, #tpu.memory_space<vmem>>, vector<1x8x16xf32>
      tpu.vector_store %arg7[%c0_225, %c0_226, %c0_227], %425 {strides = array<i32>} : memref<1x8x16xf32, #tpu.memory_space<vmem>>, vector<1x8x16xf32>,
    } else {
    }
    return
  }
  func.func @transform_0(%arg0: i32, %arg1: i32, %arg2: i32) -> (i32, i32, i32) {
    %c0_i32 = arith.constant 0 : i32
    %c0_i32_0 = arith.constant 0 : i32
    return %arg0, %arg1, %c0_i32 : i32, i32, i32
  }
  func.func @transform_1(%arg0: i32, %arg1: i32, %arg2: i32) -> (i32, i32, i32) {
    %c0_i32 = arith.constant 0 : i32
    %c0_i32_0 = arith.constant 0 : i32
    return %arg0, %c0_i32, %arg2 : i32, i32, i32
  }
  func.func @transform_2(%arg0: i32, %arg1: i32, %arg2: i32) -> (i32, i32, i32) {
    %c0_i32 = arith.constant 0 : i32
    %c0_i32_0 = arith.constant 0 : i32
    return %arg0, %arg2, %c0_i32 : i32, i32, i32
  }
  func.func @transform_3(%arg0: i32, %arg1: i32, %arg2: i32) -> i32 {
    %c0_i32 = arith.constant 0 : i32
    %c0_i32_0 = arith.constant 0 : i32
    return %c0_i32 : i32
  }
  func.func @transform_4(%arg0: i32, %arg1: i32, %arg2: i32) -> (i32, i32, i32) {
    %c0_i32 = arith.constant 0 : i32
    %c0_i32_0 = arith.constant 0 : i32
    return %arg0, %arg1, %c0_i32 : i32, i32, i32
  }
}

</mosaic_0001>

<llo_original>
// kernel: tpu_custom_call.1
$region0: #{tpu_custom_call.1}
  #allocation0 [shape = 'u32[]', space=smem, size = 0x4, offset = 0x4, fixed_abs, tag = 'smem constant byte address 0x4 - core index']
  #allocation1 [shape = 'u32[144,128]{1,0:T(1,128)}', space=vmem, size = 0x12000, scoped, tag = 'internal scratch']
  #allocation2 [shape = 'f32[1,8,1]{2,1,0:T(8,128)}', space=vmem, size = 0x1000, scoped, tag = 'scratch operand']
  #allocation3 [shape = 'f32[1,8,1]{2,1,0:T(8,128)}', space=vmem, size = 0x1000, scoped, tag = 'scratch operand']
  #allocation4 [shape = 'f32[1,8,16]{2,1,0:T(8,128)}', space=vmem, size = 0x1000, scoped, tag = 'scratch operand']
  %s0 = inlined_call_operand.vmem [shape: bf16[2,8,32], index: 0, kind: input, shape index: {}]
  %s1 = inlined_call_operand.vmem [shape: bf16[2,32,128], index: 1, kind: input, shape index: {}]
  %s2 = inlined_call_operand.vmem [shape: bf16[2,128,16], index: 2, kind: input, shape index: {}]
  %s3 = inlined_call_operand.vmem [shape: f32[32], index: 3, kind: input, shape index: {}]
  %s4 = inlined_call_operand.hbm [shape: f32[2,8,16], index: 4, kind: output, shape index: {}]
  %s5 = sld [smem:[#allocation0]]
  $region61: #{tpu_custom_call.1} parent=0
    _
  %s7 = ssub.s32 1, %s5
  %s8 = scalar_select 0, %s7, %s5
  $region1: #{tpu_custom_call.1} parent=0
    #allocation5 [shape = 'u8[512]{0}', space=smem, size = 0x200, scoped, tag = 'input window, operand 3, single buffered']
    #allocation6 [shape = 's32[2]{0}', space=sflag, size = 0x8, scoped, tag = 'scoped memory for tpu_custom_call.1']
    #allocation7 [shape = 's32[2]{0}', space=sflag, size = 0x8, scoped, tag = 'scoped memory for tpu_custom_call.1']
    #allocation8 [shape = 'u8[8192]{0}', space=vmem, size = 0x2000, scoped, tag = 'output window, operand 0']
    %9 = vsyncpa [#allocation7], 0
    %10 = vsyncpa [#allocation6], 0
    %s11 = scalar_lea.sflag [#allocation6], 1
    %12 = vsyncpa %s11, 0
    loop: start=0, step=1, limit=4
    $region2: #{tpu_custom_call.1} parent=1 // loop_pre_header
      _
    $region3: #{tpu_custom_call.1} parent=1 // loop_header
      %s14 = sphi 0, %s18
      %p15 = scmp.ge.s32.totalorder %s14, 4
      %s21 = sphi 0, %s40
      %s22 = sphi 0, %s36
      %s23 = sphi 0, %s32
      %s24 = sphi 0, %s21
      %s25 = sphi 0, %s22
      %s26 = sphi 0, %s23
      %s27 = sphi 0, %s24
      %s28 = sphi 0, %s25
      %s29 = sphi 0, %s26
      %s45 = sphi 0, %s47
      %s48 = sphi 0, %s45
      %s49 = sphi 0, %s48
      %s65 = sphi 0, %s49
      %s73 = sphi 0, %s75
      %s76 = sphi 0, %s73
      %s77 = sphi 0, %s76
      %s93 = sphi 0, %s77
      %s101 = sphi 0, %s103
      %s104 = sphi 0, %s101
      %s105 = sphi 0, %s104
      %s121 = sphi 0, %s105
      %s125 = sphi 0, %s125
      %s127 = sphi 0, %s125
      %s128 = sphi 0, %s127
      %s142 = sphi 0, %s128
      %s150 = sphi 0, %s152
      %s153 = sphi 0, %s150
      %s154 = sphi 0, %s153
      %s170 = sphi 0, %s154
    $region4: #{tpu_custom_call.1} parent=1 // loop_header_branch
      %17 = sbr.rel (%p15) target = $region8
    $region5: #{tpu_custom_call.1} parent=1 // loop_body
      %s19 = ssub.s32 %s14, 1
      %s20 = ssub.s32 %s14, 2
      %s30 = sadd.s32 1, %s23
      %p31 = scmp.ge.s32.totalorder %s30, 1
      %s32 = scalar_select %p31, 0, %s30
      %s33 = sadd.s32 1, %s22
      %s34 = scalar_select %p31, %s33, %s22
      %p35 = scmp.ge.s32.totalorder %s34, 1
      %s36 = scalar_select %p35, 0, %s34
      %s37 = sadd.s32 1, %s21
      %s38 = scalar_select %p35, %s37, %s21
      %p39 = scmp.ge.s32.totalorder %s38, 2
      %s40 = scalar_select %p39, 0, %s38
      %s41 = ssub.s32 %s21, %s40
      %s42 = ssub.s32 %s22, %s36
      %s43 = sor.u32 %s41, %s42
      %p44 = scmp.eq.s32.totalorder %s43, 0
      %s46 = sadd.s32 %s45, 1
      %s47 = scalar_select %p44, %s45, %s46
      %p50 = pneg %p44
      %p51 = scmp.eq.s32.totalorder %s14, 1
      %p52 = por %p50, %p51
      %p53 = scmp.ne.s32.totalorder %s45, %s48
      %p54 = scmp.eq.s32.totalorder %s14, 0
      %p55 = por %p53, %p54
      %p56 = scmp.ne.s32.totalorder %s45, %s48
      %p57 = scmp.eq.s32.totalorder %s19, 1
      %p58 = por %p56, %p57
      %p59 = scmp.ne.s32.totalorder %s48, %s49
      %p60 = scmp.eq.s32.totalorder %s19, 0
      %p61 = por %p59, %p60
      %p62 = scmp.ne.s32.totalorder %s48, %s49
      %p63 = scmp.eq.s32.totalorder %s20, 1
      %p64 = por %p62, %p63
      %p66 = scmp.ne.s32.totalorder %s49, %s65
      %p67 = scmp.eq.s32.totalorder %s20, 0
      %p68 = por %p66, %p67
      %s69 = ssub.s32 %s21, %s40
      %s70 = ssub.s32 %s23, %s32
      %s71 = sor.u32 %s69, %s70
      %p72 = scmp.eq.s32.totalorder %s71, 0
      %s74 = sadd.s32 %s73, 1
      %s75 = scalar_select %p72, %s73, %s74
      %p78 = pneg %p72
      %p79 = scmp.eq.s32.totalorder %s14, 1
      %p80 = por %p78, %p79
      %p81 = scmp.ne.s32.totalorder %s73, %s76
      %p82 = scmp.eq.s32.totalorder %s14, 0
      %p83 = por %p81, %p82
      %p84 = scmp.ne.s32.totalorder %s73, %s76
      %p85 = scmp.eq.s32.totalorder %s19, 1
      %p86 = por %p84, %p85
      %p87 = scmp.ne.s32.totalorder %s76, %s77
      %p88 = scmp.eq.s32.totalorder %s19, 0
      %p89 = por %p87, %p88
      %p90 = scmp.ne.s32.totalorder %s76, %s77
      %p91 = scmp.eq.s32.totalorder %s20, 1
      %p92 = por %p90, %p91
      %p94 = scmp.ne.s32.totalorder %s77, %s93
      %p95 = scmp.eq.s32.totalorder %s20, 0
      %p96 = por %p94, %p95
      %s97 = ssub.s32 %s21, %s40
      %s98 = ssub.s32 %s23, %s32
      %s99 = sor.u32 %s97, %s98
      %p100 = scmp.eq.s32.totalorder %s99, 0
      %s102 = sadd.s32 %s101, 1
      %s103 = scalar_select %p100, %s101, %s102
      %p106 = pneg %p100
      %p107 = scmp.eq.s32.totalorder %s14, 1
      %p108 = por %p106, %p107
      %p109 = scmp.ne.s32.totalorder %s101, %s104
      %p110 = scmp.eq.s32.totalorder %s14, 0
      %p111 = por %p109, %p110
      %p112 = scmp.ne.s32.totalorder %s101, %s104
      %p113 = scmp.eq.s32.totalorder %s19, 1
      %p114 = por %p112, %p113
      %p115 = scmp.ne.s32.totalorder %s104, %s105
      %p116 = scmp.eq.s32.totalorder %s19, 0
      %p117 = por %p115, %p116
      %p118 = scmp.ne.s32.totalorder %s104, %s105
      %p119 = scmp.eq.s32.totalorder %s20, 1
      %p120 = por %p118, %p119
      %p122 = scmp.ne.s32.totalorder %s105, %s121
      %p123 = scmp.eq.s32.totalorder %s20, 0
      %p124 = por %p122, %p123
      %s126 = sadd.s32 %s125, 1
      %p129 = scmp.eq.s32.totalorder %s14, 1
      %p130 = scmp.ne.s32.totalorder %s125, %s127
      %p131 = scmp.eq.s32.totalorder %s14, 0
      %p132 = por %p130, %p131
      %p133 = scmp.ne.s32.totalorder %s125, %s127
      %p134 = scmp.eq.s32.totalorder %s19, 1
      %p135 = por %p133, %p134
      %p136 = scmp.ne.s32.totalorder %s127, %s128
      %p137 = scmp.eq.s32.totalorder %s19, 0
      %p138 = por %p136, %p137
      %p139 = scmp.ne.s32.totalorder %s127, %s128
      %p140 = scmp.eq.s32.totalorder %s20, 1
      %p141 = por %p139, %p140
      %p143 = scmp.ne.s32.totalorder %s128, %s142
      %p144 = scmp.eq.s32.totalorder %s20, 0
      %p145 = por %p143, %p144
      %s146 = ssub.s32 %s21, %s40
      %s147 = ssub.s32 %s22, %s36
      %s148 = sor.u32 %s146, %s147
      %p149 = scmp.eq.s32.totalorder %s148, 0
      %s151 = sadd.s32 %s150, 1
      %s152 = scalar_select %p149, %s150, %s151
      %p155 = pneg %p149
      %p156 = scmp.eq.s32.totalorder %s14, 1
      %p157 = por %p155, %p156
      %p158 = scmp.ne.s32.totalorder %s150, %s153
      %p159 = scmp.eq.s32.totalorder %s14, 0
      %p160 = por %p158, %p159
      %p161 = scmp.ne.s32.totalorder %s150, %s153
      %p162 = scmp.eq.s32.totalorder %s19, 1
      %p163 = por %p161, %p162
      %p164 = scmp.ne.s32.totalorder %s153, %s154
      %p165 = scmp.eq.s32.totalorder %s19, 0
      %p166 = por %p164, %p165
      %p167 = scmp.ne.s32.totalorder %s153, %s154
      %p168 = scmp.eq.s32.totalorder %s20, 1
      %p169 = por %p167, %p168
      %p171 = scmp.ne.s32.totalorder %s154, %s170
      %p172 = scmp.eq.s32.totalorder %s20, 0
      %p173 = por %p171, %p172
      %p174 = scmp.le.s32.totalorder 1, %s14
      %p175 = scmp.lt.s32.totalorder %s14, 3
      %p176 = pnand %p174, %p175
      %p177 = pneg %p176
      // Predicated region
      $region9: #{tpu_custom_call.1} parent=5 // pred_check
        _
      $region10: #{tpu_custom_call.1} parent=5 // pred_check_branch
        %179 = sbr.rel (%p176) target = $region12
      $region11: #{tpu_custom_call.1} parent=5 // pred_region
        %s180 = ssub.s32 %s14, 1
        // Predicated region
        $region13: #{tpu_custom_call.1} parent=11 // pred_check
          %p181 = pneg %p138
        $region14: #{tpu_custom_call.1} parent=11 // pred_check_branch
          %183 = sbr.rel (%p181) target = $region16
        $region15: #{tpu_custom_call.1} parent=11 // pred_region
          %s185 = ssub.s32 16, 16
          %186 = vsyncadd [#allocation7], %s185
          %s188 = sshll.u32 %s3, 4
          %s189 = int_to_ptr.vmem [resolvable:$true] %s188
          %191 = dma.vmem_to_smem %s189, 16, [#allocation5], [#allocation7]
        $region16: #{tpu_custom_call.1} parent=11 // pred_fallthru
          _
      $region12: #{tpu_custom_call.1} parent=5 // pred_fallthru
        _
      %p192 = scmp.lt.s32.totalorder %s14, 2
      // Predicated region
      $region17: #{tpu_custom_call.1} parent=5 // pred_check
        %p193 = pneg %p192
      $region18: #{tpu_custom_call.1} parent=5 // pred_check_branch
        %195 = sbr.rel (%p193) target = $region20
      $region19: #{tpu_custom_call.1} parent=5 // pred_region
        // Predicated region
        $region21: #{tpu_custom_call.1} parent=19 // pred_check
          %p196 = pneg %p55
        $region22: #{tpu_custom_call.1} parent=19 // pred_check_branch
          %198 = sbr.rel (%p196) target = $region24
        $region23: #{tpu_custom_call.1} parent=19 // pred_region
          %p199 = scmp.lt.s32.totalorder %s21, 1
          %s200 = scalar_select %p199, %s21, 1
          %p201 = scmp.lt.s32.totalorder %s22, 0
          %s202 = scalar_select %p201, %s22, 0
          %s203 = sadd.s32 %s202, %s200
          %s204 = smul.addr %s203, 4
          %s205 = scalar_lea.vmem %s0, %s204
        $region24: #{tpu_custom_call.1} parent=19 // pred_fallthru
          _
        // Predicated region
        $region25: #{tpu_custom_call.1} parent=19 // pred_check
          %p206 = pneg %p83
        $region26: #{tpu_custom_call.1} parent=19 // pred_check_branch
          %208 = sbr.rel (%p206) target = $region28
        $region27: #{tpu_custom_call.1} parent=19 // pred_region
          %p209 = scmp.lt.s32.totalorder %s21, 1
          %s210 = scalar_select %p209, %s21, 1
          %p211 = scmp.lt.s32.totalorder %s23, 0
          %s212 = scalar_select %p211, %s23, 0
          %s213 = smul.addr %s210, 4
          %s214 = sadd.s32 %s212, %s213
          %s215 = smul.addr %s214, 4
          %s216 = scalar_lea.vmem %s1, %s215
        $region28: #{tpu_custom_call.1} parent=19 // pred_fallthru
          _
        // Predicated region
        $region29: #{tpu_custom_call.1} parent=19 // pred_check
          %p217 = pneg %p111
        $region30: #{tpu_custom_call.1} parent=19 // pred_check_branch
          %219 = sbr.rel (%p217) target = $region32
        $region31: #{tpu_custom_call.1} parent=19 // pred_region
          %s220 = smul.u32 16, %s23
          %p221 = scmp.lt.s32.totalorder %s21, 1
          %s222 = scalar_select %p221, %s21, 1
          %p223 = scmp.lt.s32.totalorder %s220, 15
          %s224 = scalar_select %p223, %s220, 15
          %s225 = smul.addr %s222, 16
          %s226 = sadd.s32 %s224, %s225
          %s227 = smul.addr %s226, 4
          %s228 = scalar_lea.vmem %s2, %s227
          %s229 = smul.u32 16, %s23
        $region32: #{tpu_custom_call.1} parent=19 // pred_fallthru
          _
      $region20: #{tpu_custom_call.1} parent=5 // pred_fallthru
        _
      %p230 = scmp.le.s32.totalorder 1, %s14
      %p231 = scmp.lt.s32.totalorder %s14, 3
      %p232 = pnand %p230, %p231
      %p233 = pneg %p232
      // Predicated region
      $region33: #{tpu_custom_call.1} parent=5 // pred_check
        _
      $region34: #{tpu_custom_call.1} parent=5 // pred_check_branch
        %235 = sbr.rel (%p232) target = $region36
      $region35: #{tpu_custom_call.1} parent=5 // pred_region
        %s236 = ssub.s32 %s14, 1
        // Predicated region
        $region37: #{tpu_custom_call.1} parent=35 // pred_check
          %p237 = pneg %p138
        $region38: #{tpu_custom_call.1} parent=35 // pred_check_branch
          %239 = sbr.rel (%p237) target = $region40
        $region39: #{tpu_custom_call.1} parent=35 // pred_region
          %240 = dma.done [#allocation7], 16
        $region40: #{tpu_custom_call.1} parent=35 // pred_fallthru
          _
        %241 = sfence
        %p242 = scmp.lt.s32.totalorder %s24, 1
        %s243 = scalar_select %p242, %s24, 1
        %p244 = scmp.lt.s32.totalorder %s25, 0
        %s245 = scalar_select %p244, %s25, 0
        %s246 = sadd.s32 %s245, %s243
        %s247 = smul.addr %s246, 4
        %s248 = scalar_lea.vmem %s0, %s247
        %p249 = pneg %p61
        %p250 = pneg %p58
        %p251 = scmp.lt.s32.totalorder %s24, 1
        %s252 = scalar_select %p251, %s24, 1
        %p253 = scmp.lt.s32.totalorder %s26, 0
        %s254 = scalar_select %p253, %s26, 0
        %s255 = smul.addr %s252, 4
        %s256 = sadd.s32 %s254, %s255
        %s257 = smul.addr %s256, 4
        %s258 = scalar_lea.vmem %s1, %s257
        %p259 = pneg %p89
        %p260 = pneg %p86
        %s261 = smul.u32 16, %s26
        %p262 = scmp.lt.s32.totalorder %s24, 1
        %s263 = scalar_select %p262, %s24, 1
        %p264 = scmp.lt.s32.totalorder %s261, 15
        %s265 = scalar_select %p264, %s261, 15
        %s266 = smul.addr %s263, 16
        %s267 = sadd.s32 %s265, %s266
        %s268 = smul.addr %s267, 4
        %s269 = scalar_lea.vmem %s2, %s268
        %p270 = pneg %p117
        %p271 = pneg %p114
        %p272 = pneg %p138
        %p273 = pneg %p135
        %p274 = pneg %p166
        %p275 = pneg %p163
        %s276 = sand.u32 %s153, 1
        %s277 = scalar_lea.sflag [#allocation6], %s276
        %s278 = sand.u32 %s153, 1
        %s279 = smul.addr %s278, 8
        %s280 = scalar_lea.vmem [#allocation8], %s279
        %p281 = scmp.lt.s32.totalorder %s24, 1
        %s282 = scalar_select %p281, %s24, 1
        %p283 = scmp.lt.s32.totalorder %s25, 0
        %s284 = scalar_select %p283, %s25, 0
        %s285 = sadd.s32 %s284, %s282
        %s286 = smul.addr %s285, 4
        %s287 = scalar_lea.vmem %s0, %s286
        %p288 = scmp.lt.s32.totalorder %s24, 1
        %s289 = scalar_select %p288, %s24, 1
        %p290 = scmp.lt.s32.totalorder %s26, 0
        %s291 = scalar_select %p290, %s26, 0
        %s292 = smul.addr %s289, 4
        %s293 = sadd.s32 %s291, %s292
        %s294 = smul.addr %s293, 4
        %s295 = scalar_lea.vmem %s1, %s294
        %s296 = smul.u32 16, %s26
        %p297 = scmp.lt.s32.totalorder %s24, 1
        %s298 = scalar_select %p297, %s24, 1
        %p299 = scmp.lt.s32.totalorder %s296, 15
        %s300 = scalar_select %p299, %s296, 15
        %s301 = smul.addr %s298, 16
        %s302 = sadd.s32 %s300, %s301
        %s303 = smul.addr %s302, 4
        %s304 = scalar_lea.vmem %s2, %s303
        %s305 = smul.u32 16, %s26
        %p307 = scmp.eq.s32.totalorder %s26, 0
        // Predicated region
        $region41: #{tpu_custom_call.1} parent=35 // pred_check
          %p308 = pneg %p307
        $region42: #{tpu_custom_call.1} parent=35 // pred_check_branch
          %310 = sbr.rel (%p308) target = $region44
        $region43: #{tpu_custom_call.1} parent=35 // pred_region
          %vm311 = vcmask 7168
          %312 = vst.msk [vmem:[#allocation2] sm:$0xff] %vm311, -1e+30
          %313 = vst.msk [vmem:[#allocation3] sm:$0xff] %vm311, 0.0
          %vm314 = vcmask 130048
          %315 = vst.msk [vmem:[#allocation4] sm:$0xff] %vm314, 0.0
        $region44: #{tpu_custom_call.1} parent=35 // pred_fallthru
          _
        %v316 = vld [vmem:[%s287] sm:$0xf]
        %v317 = vunpack.c.l.bf16 %v316
        %v318 = vld [vmem:[%s295] sm:$0x1]
        %v319 = vunpack.c.l.bf16 %v318
        %321 = vset.pattern.permute.xlu0 0
        %322 = vperm.xlu0 %321, %v317
        %v323 = vpop.permute.xlu0 %322
        %v325 = vlaneseq
        %v326 = vshrl.u32 %v325, 7
        %v327 = vsub.s32 0, %v326
        %v328 = vrot.slane %v319, %v327
        %v329 = vadd.f32 %v323, %v328
        %v330 = vtanh.pop %v329
        %s331 = sld [smem:[#allocation5]]
        %v332 = vstv %s331
        %v333 = vmul.f32 %v332, %v330
        %334 = vset.pattern.permute.xlu0 1
        %335 = vperm.xlu0 %334, %v317
        %v336 = vpop.permute.xlu0 %335
        %v338 = vlaneseq
        %v339 = vshrl.u32 %v338, 7
        %v340 = vsub.s32 1, %v339
        %v341 = vrot.slane %v319, %v340
        %v342 = vadd.f32 %v336, %v341
        %v343 = vtanh.pop %v342
        %s344 = sld [smem:[#allocation5 + $0x1]]
        %v345 = vstv %s344
        %v346 = vmul.f32 %v345, %v343
        %v347 = vadd.f32 %v333, %v346
        %v348 = vld [vmem:[%s295] sm:$0x2]
        %v349 = vunpack.c.l.bf16 %v348
        %350 = vset.pattern.permute.xlu0 2
        %351 = vperm.xlu0 %350, %v317
        %v352 = vpop.permute.xlu0 %351
        %v354 = vlaneseq
        %v355 = vshrl.u32 %v354, 7
        %v356 = vsub.s32 2, %v355
        %v357 = vrot.slane %v349, %v356
        %v358 = vadd.f32 %v352, %v357
        %v359 = vtanh.pop %v358
        %s360 = sld [smem:[#allocation5 + $0x2]]
        %v361 = vstv %s360
        %v362 = vmul.f32 %v361, %v359
        %v363 = vadd.f32 %v347, %v362
        %364 = vset.pattern.permute.xlu0 3
        %365 = vperm.xlu0 %364, %v317
        %v366 = vpop.permute.xlu0 %365
        %v368 = vlaneseq
        %v369 = vshrl.u32 %v368, 7
        %v370 = vsub.s32 3, %v369
        %v371 = vrot.slane %v349, %v370
        %v372 = vadd.f32 %v366, %v371
        %v373 = vtanh.pop %v372
        %s374 = sld [smem:[#allocation5 + $0x3]]
        %v375 = vstv %s374
        %v376 = vmul.f32 %v375, %v373
        %v377 = vadd.f32 %v363, %v376
        %v378 = vld [vmem:[%s295] sm:$0x4]
        %v379 = vunpack.c.l.bf16 %v378
        %380 = vset.pattern.permute.xlu0 4
        %381 = vperm.xlu0 %380, %v317
        %v382 = vpop.permute.xlu0 %381
        %v384 = vlaneseq
        %v385 = vshrl.u32 %v384, 7
        %v386 = vsub.s32 4, %v385
        %v387 = vrot.slane %v379, %v386
        %v388 = vadd.f32 %v382, %v387
        %v389 = vtanh.pop %v388
        %s390 = sld [smem:[#allocation5 + $0x4]]
        %v391 = vstv %s390
        %v392 = vmul.f32 %v391, %v389
        %v393 = vadd.f32 %v377, %v392
        %394 = vset.pattern.permute.xlu0 5
        %395 = vperm.xlu0 %394, %v317
        %v396 = vpop.permute.xlu0 %395
        %v398 = vlaneseq
        %v399 = vshrl.u32 %v398, 7
        %v400 = vsub.s32 5, %v399
        %v401 = vrot.slane %v379, %v400
        %v402 = vadd.f32 %v396, %v401
        %v403 = vtanh.pop %v402
        %s404 = sld [smem:[#allocation5 + $0x5]]
        %v405 = vstv %s404
        %v406 = vmul.f32 %v405, %v403
        %v407 = vadd.f32 %v393, %v406
        %v408 = vld [vmem:[%s295] sm:$0x8]
        %v409 = vunpack.c.l.bf16 %v408
        %410 = vset.pattern.permute.xlu0 6
        %411 = vperm.xlu0 %410, %v317
        %v412 = vpop.permute.xlu0 %411
        %v414 = vlaneseq
        %v415 = vshrl.u32 %v414, 7
        %v416 = vsub.s32 6, %v415
        %v417 = vrot.slane %v409, %v416
        %v418 = vadd.f32 %v412, %v417
        %v419 = vtanh.pop %v418
        %s420 = sld [smem:[#allocation5 + $0x6]]
        %v421 = vstv %s420
        %v422 = vmul.f32 %v421, %v419
        %v423 = vadd.f32 %v407, %v422
        %424 = vset.pattern.permute.xlu0 7
        %425 = vperm.xlu0 %424, %v317
        %v426 = vpop.permute.xlu0 %425
        %v428 = vlaneseq
        %v429 = vshrl.u32 %v428, 7
        %v430 = vsub.s32 7, %v429
        %v431 = vrot.slane %v409, %v430
        %v432 = vadd.f32 %v426, %v431
        %v433 = vtanh.pop %v432
        %s434 = sld [smem:[#allocation5 + $0x7]]
        %v435 = vstv %s434
        %v436 = vmul.f32 %v435, %v433
        %v437 = vadd.f32 %v423, %v436
        %v438 = vld [vmem:[%s295 + $0x4] sm:$0x1]
        %v439 = vunpack.c.l.bf16 %v438
        %440 = vset.pattern.permute.xlu0 8
        %441 = vperm.xlu0 %440, %v317
        %v442 = vpop.permute.xlu0 %441
        %v444 = vlaneseq
        %v445 = vshrl.u32 %v444, 7
        %v446 = vsub.s32 0, %v445
        %v447 = vrot.slane %v439, %v446
        %v448 = vadd.f32 %v442, %v447
        %v449 = vtanh.pop %v448
        %s450 = sld [smem:[#allocation5 + $0x8]]
        %v451 = vstv %s450
        %v452 = vmul.f32 %v451, %v449
        %v453 = vadd.f32 %v437, %v452
        %454 = vset.pattern.permute.xlu0 9
        %455 = vperm.xlu0 %454, %v317
        %v456 = vpop.permute.xlu0 %455
        %v458 = vlaneseq
        %v459 = vshrl.u32 %v458, 7
        %v460 = vsub.s32 1, %v459
        %v461 = vrot.slane %v439, %v460
        %v462 = vadd.f32 %v456, %v461
        %v463 = vtanh.pop %v462
        %s464 = sld [smem:[#allocation5 + $0x9]]
        %v465 = vstv %s464
        %v466 = vmul.f32 %v465, %v463
        %v467 = vadd.f32 %v453, %v466
        %v468 = vld [vmem:[%s295 + $0x4] sm:$0x2]
        %v469 = vunpack.c.l.bf16 %v468
        %470 = vset.pattern.permute.xlu0 10
        %471 = vperm.xlu0 %470, %v317
        %v472 = vpop.permute.xlu0 %471
        %v474 = vlaneseq
        %v475 = vshrl.u32 %v474, 7
        %v476 = vsub.s32 2, %v475
        %v477 = vrot.slane %v469, %v476
        %v478 = vadd.f32 %v472, %v477
        %v479 = vtanh.pop %v478
        %s480 = sld [smem:[#allocation5 + $0xa]]
        %v481 = vstv %s480
        %v482 = vmul.f32 %v481, %v479
        %v483 = vadd.f32 %v467, %v482
        %484 = vset.pattern.permute.xlu0 11
        %485 = vperm.xlu0 %484, %v317
        %v486 = vpop.permute.xlu0 %485
        %v488 = vlaneseq
        %v489 = vshrl.u32 %v488, 7
        %v490 = vsub.s32 3, %v489
        %v491 = vrot.slane %v469, %v490
        %v492 = vadd.f32 %v486, %v491
        %v493 = vtanh.pop %v492
        %s494 = sld [smem:[#allocation5 + $0xb]]
        %v495 = vstv %s494
        %v496 = vmul.f32 %v495, %v493
        %v497 = vadd.f32 %v483, %v496
        %v498 = vld [vmem:[%s295 + $0x4] sm:$0x4]
        %v499 = vunpack.c.l.bf16 %v498
        %500 = vset.pattern.permute.xlu0 12
        %501 = vperm.xlu0 %500, %v317
        %v502 = vpop.permute.xlu0 %501
        %v504 = vlaneseq
        %v505 = vshrl.u32 %v504, 7
        %v506 = vsub.s32 4, %v505
        %v507 = vrot.slane %v499, %v506
        %v508 = vadd.f32 %v502, %v507
        %v509 = vtanh.pop %v508
        %s510 = sld [smem:[#allocation5 + $0xc]]
        %v511 = vstv %s510
        %v512 = vmul.f32 %v511, %v509
        %v513 = vadd.f32 %v497, %v512
        %514 = vset.pattern.permute.xlu0 13
        %515 = vperm.xlu0 %514, %v317
        %v516 = vpop.permute.xlu0 %515
        %v518 = vlaneseq
        %v519 = vshrl.u32 %v518, 7
        %v520 = vsub.s32 5, %v519
        %v521 = vrot.slane %v499, %v520
        %v522 = vadd.f32 %v516, %v521
        %v523 = vtanh.pop %v522
        %s524 = sld [smem:[#allocation5 + $0xd]]
        %v525 = vstv %s524
        %v526 = vmul.f32 %v525, %v523
        %v527 = vadd.f32 %v513, %v526
        %v528 = vld [vmem:[%s295 + $0x4] sm:$0x8]
        %v529 = vunpack.c.l.bf16 %v528
        %530 = vset.pattern.permute.xlu0 14
        %531 = vperm.xlu0 %530, %v317
        %v532 = vpop.permute.xlu0 %531
        %v534 = vlaneseq
        %v535 = vshrl.u32 %v534, 7
        %v536 = vsub.s32 6, %v535
        %v537 = vrot.slane %v529, %v536
        %v538 = vadd.f32 %v532, %v537
        %v539 = vtanh.pop %v538
        %s540 = sld [smem:[#allocation5 + $0xe]]
        %v541 = vstv %s540
        %v542 = vmul.f32 %v541, %v539
        %v543 = vadd.f32 %v527, %v542
        %544 = vset.pattern.permute.xlu0 15
        %545 = vperm.xlu0 %544, %v317
        %v546 = vpop.permute.xlu0 %545
        %v548 = vlaneseq
        %v549 = vshrl.u32 %v548, 7
        %v550 = vsub.s32 7, %v549
        %v551 = vrot.slane %v529, %v550
        %v552 = vadd.f32 %v546, %v551
        %v553 = vtanh.pop %v552
        %s554 = sld [smem:[#allocation5 + $0xf]]
        %v555 = vstv %s554
        %v556 = vmul.f32 %v555, %v553
        %v557 = vadd.f32 %v543, %v556
        %v558 = vld [vmem:[%s295 + $0x8] sm:$0x1]
        %v559 = vunpack.c.l.bf16 %v558
        %560 = vset.pattern.permute.xlu0 16
        %561 = vperm.xlu0 %560, %v317
        %v562 = vpop.permute.xlu0 %561
        %v564 = vlaneseq
        %v565 = vshrl.u32 %v564, 7
        %v566 = vsub.s32 0, %v565
        %v567 = vrot.slane %v559, %v566
        %v568 = vadd.f32 %v562, %v567
        %v569 = vtanh.pop %v568
        %s570 = sld [smem:[#allocation5 + $0x10]]
        %v571 = vstv %s570
        %v572 = vmul.f32 %v571, %v569
        %v573 = vadd.f32 %v557, %v572
        %574 = vset.pattern.permute.xlu0 17
        %575 = vperm.xlu0 %574, %v317
        %v576 = vpop.permute.xlu0 %575
        %v578 = vlaneseq
        %v579 = vshrl.u32 %v578, 7
        %v580 = vsub.s32 1, %v579
        %v581 = vrot.slane %v559, %v580
        %v582 = vadd.f32 %v576, %v581
        %v583 = vtanh.pop %v582
        %s584 = sld [smem:[#allocation5 + $0x11]]
        %v585 = vstv %s584
        %v586 = vmul.f32 %v585, %v583
        %v587 = vadd.f32 %v573, %v586
        %v588 = vld [vmem:[%s295 + $0x8] sm:$0x2]
        %v589 = vunpack.c.l.bf16 %v588
        %590 = vset.pattern.permute.xlu0 18
        %591 = vperm.xlu0 %590, %v317
        %v592 = vpop.permute.xlu0 %591
        %v594 = vlaneseq
        %v595 = vshrl.u32 %v594, 7
        %v596 = vsub.s32 2, %v595
        %v597 = vrot.slane %v589, %v596
        %v598 = vadd.f32 %v592, %v597
        %v599 = vtanh.pop %v598
        %s600 = sld [smem:[#allocation5 + $0x12]]
        %v601 = vstv %s600
        %v602 = vmul.f32 %v601, %v599
        %v603 = vadd.f32 %v587, %v602
        %604 = vset.pattern.permute.xlu0 19
        %605 = vperm.xlu0 %604, %v317
        %v606 = vpop.permute.xlu0 %605
        %v608 = vlaneseq
        %v609 = vshrl.u32 %v608, 7
        %v610 = vsub.s32 3, %v609
        %v611 = vrot.slane %v589, %v610
        %v612 = vadd.f32 %v606, %v611
        %v613 = vtanh.pop %v612
        %s614 = sld [smem:[#allocation5 + $0x13]]
        %v615 = vstv %s614
        %v616 = vmul.f32 %v615, %v613
        %v617 = vadd.f32 %v603, %v616
        %v618 = vld [vmem:[%s295 + $0x8] sm:$0x4]
        %v619 = vunpack.c.l.bf16 %v618
        %620 = vset.pattern.permute.xlu0 20
        %621 = vperm.xlu0 %620, %v317
        %v622 = vpop.permute.xlu0 %621
        %v624 = vlaneseq
        %v625 = vshrl.u32 %v624, 7
        %v626 = vsub.s32 4, %v625
        %v627 = vrot.slane %v619, %v626
        %v628 = vadd.f32 %v622, %v627
        %v629 = vtanh.pop %v628
        %s630 = sld [smem:[#allocation5 + $0x14]]
        %v631 = vstv %s630
        %v632 = vmul.f32 %v631, %v629
        %v633 = vadd.f32 %v617, %v632
        %634 = vset.pattern.permute.xlu0 21
        %635 = vperm.xlu0 %634, %v317
        %v636 = vpop.permute.xlu0 %635
        %v638 = vlaneseq
        %v639 = vshrl.u32 %v638, 7
        %v640 = vsub.s32 5, %v639
        %v641 = vrot.slane %v619, %v640
        %v642 = vadd.f32 %v636, %v641
        %v643 = vtanh.pop %v642
        %s644 = sld [smem:[#allocation5 + $0x15]]
        %v645 = vstv %s644
        %v646 = vmul.f32 %v645, %v643
        %v647 = vadd.f32 %v633, %v646
        %v648 = vld [vmem:[%s295 + $0x8] sm:$0x8]
        %v649 = vunpack.c.l.bf16 %v648
        %650 = vset.pattern.permute.xlu0 22
        %651 = vperm.xlu0 %650, %v317
        %v652 = vpop.permute.xlu0 %651
        %v654 = vlaneseq
        %v655 = vshrl.u32 %v654, 7
        %v656 = vsub.s32 6, %v655
        %v657 = vrot.slane %v649, %v656
        %v658 = vadd.f32 %v652, %v657
        %v659 = vtanh.pop %v658
        %s660 = sld [smem:[#allocation5 + $0x16]]
        %v661 = vstv %s660
        %v662 = vmul.f32 %v661, %v659
        %v663 = vadd.f32 %v647, %v662
        %664 = vset.pattern.permute.xlu0 23
        %665 = vperm.xlu0 %664, %v317
        %v666 = vpop.permute.xlu0 %665
        %v668 = vlaneseq
        %v669 = vshrl.u32 %v668, 7
        %v670 = vsub.s32 7, %v669
        %v671 = vrot.slane %v649, %v670
        %v672 = vadd.f32 %v666, %v671
        %v673 = vtanh.pop %v672
        %s674 = sld [smem:[#allocation5 + $0x17]]
        %v675 = vstv %s674
        %v676 = vmul.f32 %v675, %v673
        %v677 = vadd.f32 %v663, %v676
        %v678 = vld [vmem:[%s295 + $0xc] sm:$0x1]
        %v679 = vunpack.c.l.bf16 %v678
        %680 = vset.pattern.permute.xlu0 24
        %681 = vperm.xlu0 %680, %v317
        %v682 = vpop.permute.xlu0 %681
        %v684 = vlaneseq
        %v685 = vshrl.u32 %v684, 7
        %v686 = vsub.s32 0, %v685
        %v687 = vrot.slane %v679, %v686
        %v688 = vadd.f32 %v682, %v687
        %v689 = vtanh.pop %v688
        %s690 = sld [smem:[#allocation5 + $0x18]]
        %v691 = vstv %s690
        %v692 = vmul.f32 %v691, %v689
        %v693 = vadd.f32 %v677, %v692
        %694 = vset.pattern.permute.xlu0 25
        %695 = vperm.xlu0 %694, %v317
        %v696 = vpop.permute.xlu0 %695
        %v698 = vlaneseq
        %v699 = vshrl.u32 %v698, 7
        %v700 = vsub.s32 1, %v699
        %v701 = vrot.slane %v679, %v700
        %v702 = vadd.f32 %v696, %v701
        %v703 = vtanh.pop %v702
        %s704 = sld [smem:[#allocation5 + $0x19]]
        %v705 = vstv %s704
        %v706 = vmul.f32 %v705, %v703
        %v707 = vadd.f32 %v693, %v706
        %v708 = vld [vmem:[%s295 + $0xc] sm:$0x2]
        %v709 = vunpack.c.l.bf16 %v708
        %710 = vset.pattern.permute.xlu0 26
        %711 = vperm.xlu0 %710, %v317
        %v712 = vpop.permute.xlu0 %711
        %v714 = vlaneseq
        %v715 = vshrl.u32 %v714, 7
        %v716 = vsub.s32 2, %v715
        %v717 = vrot.slane %v709, %v716
        %v718 = vadd.f32 %v712, %v717
        %v719 = vtanh.pop %v718
        %s720 = sld [smem:[#allocation5 + $0x1a]]
        %v721 = vstv %s720
        %v722 = vmul.f32 %v721, %v719
        %v723 = vadd.f32 %v707, %v722
        %724 = vset.pattern.permute.xlu0 27
        %725 = vperm.xlu0 %724, %v317
        %v726 = vpop.permute.xlu0 %725
        %v728 = vlaneseq
        %v729 = vshrl.u32 %v728, 7
        %v730 = vsub.s32 3, %v729
        %v731 = vrot.slane %v709, %v730
        %v732 = vadd.f32 %v726, %v731
        %v733 = vtanh.pop %v732
        %s734 = sld [smem:[#allocation5 + $0x1b]]
        %v735 = vstv %s734
        %v736 = vmul.f32 %v735, %v733
        %v737 = vadd.f32 %v723, %v736
        %v738 = vld [vmem:[%s295 + $0xc] sm:$0x4]
        %v739 = vunpack.c.l.bf16 %v738
        %740 = vset.pattern.permute.xlu0 28
        %741 = vperm.xlu0 %740, %v317
        %v742 = vpop.permute.xlu0 %741
        %v744 = vlaneseq
        %v745 = vshrl.u32 %v744, 7
        %v746 = vsub.s32 4, %v745
        %v747 = vrot.slane %v739, %v746
        %v748 = vadd.f32 %v742, %v747
        %v749 = vtanh.pop %v748
        %s750 = sld [smem:[#allocation5 + $0x1c]]
        %v751 = vstv %s750
        %v752 = vmul.f32 %v751, %v749
        %v753 = vadd.f32 %v737, %v752
        %754 = vset.pattern.permute.xlu0 29
        %755 = vperm.xlu0 %754, %v317
        %v756 = vpop.permute.xlu0 %755
        %v758 = vlaneseq
        %v759 = vshrl.u32 %v758, 7
        %v760 = vsub.s32 5, %v759
        %v761 = vrot.slane %v739, %v760
        %v762 = vadd.f32 %v756, %v761
        %v763 = vtanh.pop %v762
        %s764 = sld [smem:[#allocation5 + $0x1d]]
        %v765 = vstv %s764
        %v766 = vmul.f32 %v765, %v763
        %v767 = vadd.f32 %v753, %v766
        %v768 = vld [vmem:[%s295 + $0xc] sm:$0x8]
        %v769 = vunpack.c.l.bf16 %v768
        %770 = vset.pattern.permute.xlu0 30
        %771 = vperm.xlu0 %770, %v317
        %v772 = vpop.permute.xlu0 %771
        %v774 = vlaneseq
        %v775 = vshrl.u32 %v774, 7
        %v776 = vsub.s32 6, %v775
        %v777 = vrot.slane %v769, %v776
        %v778 = vadd.f32 %v772, %v777
        %v779 = vtanh.pop %v778
        %s780 = sld [smem:[#allocation5 + $0x1e]]
        %v781 = vstv %s780
        %v782 = vmul.f32 %v781, %v779
        %v783 = vadd.f32 %v767, %v782
        %784 = vset.pattern.permute.xlu0 31
        %785 = vperm.xlu0 %784, %v317
        %v786 = vpop.permute.xlu0 %785
        %v788 = vlaneseq
        %v789 = vshrl.u32 %v788, 7
        %v790 = vsub.s32 7, %v789
        %v791 = vrot.slane %v769, %v790
        %v792 = vadd.f32 %v786, %v791
        %v793 = vtanh.pop %v792
        %s794 = sld [smem:[#allocation5 + $0x1f]]
        %v795 = vstv %s794
        %v796 = vmul.f32 %v795, %v793
        %v797 = vadd.f32 %v783, %v796
        %v798 = vlaneseq
        %v799 = vand.u32 %v798, 127
        %s800 = smul.u32 %s26, 128
        %v801 = vstv %s800
        %v802 = vadd.s32 %v799, %v801
        %vm803 = vcmp.lt.s32.totalorder %v802, 8
        %v804 = vsel %vm803, %v797, -1e+30
        %v805 = vld [vmem:[#allocation2] sm:$0xff]
        %806 = vmax.xlane.f32.xlu0 %v804
        %v807 = vpop.xlane.xlu0 %806
        %v808 = vmax.f32 %v805, %v807
        %v809 = vsub.f32 %v805, %v808
        %v810 = vmul.f32 %v809, 1.442695
        %v811 = vpow.pop %v810
        %813 = vset.pattern.permute.xlu0 0
        %814 = vperm.xlu0 %813, %v808
        %v815 = vpop.permute.xlu0 %814
        %v817 = vsub.f32 %v804, %v815
        %v818 = vmul.f32 %v817, 1.442695
        %v819 = vpow.pop %v818
        %v820 = vld [vmem:[#allocation3] sm:$0xff]
        %v821 = vmul.f32 %v811, %v820
        %822 = vadd.xlane.f32.xlu0 %v819
        %v823 = vpop.xlane.xlu0 %822
        %v824 = vadd.f32 %v821, %v823
        %vm825 = vcmask 7168
        %826 = vst.msk [vmem:[#allocation3] sm:$0xff] %vm825, %v824
        %v827 = vld [vmem:[#allocation4] sm:$0xff]
        %829 = vset.pattern.permute.xlu0 0
        %830 = vperm.xlu0 %829, %v811
        %v831 = vpop.permute.xlu0 %830
        %v833 = vmul.f32 %v831, %v827
        %v834 = vpack.c.bf16 %v819, %v819
        %v835 = vld [vmem:[%s304] sm:$0xf]
        %v836 = vld [vmem:[%s304 + $0x4] sm:$0xf]
        %v837 = vld [vmem:[%s304 + $0x8] sm:$0xf]
        %v838 = vld [vmem:[%s304 + $0xc] sm:$0xf]
        %v839 = vld [vmem:[%s304 + $0x10] sm:$0xf]
        %v840 = vld [vmem:[%s304 + $0x14] sm:$0xf]
        %v841 = vld [vmem:[%s304 + $0x18] sm:$0xf]
        %v842 = vld [vmem:[%s304 + $0x1c] sm:$0xf]
        %v843 = vld [vmem:[%s304 + $0x20] sm:$0xf]
        %v844 = vld [vmem:[%s304 + $0x24] sm:$0xf]
        %v845 = vld [vmem:[%s304 + $0x28] sm:$0xf]
        %v846 = vld [vmem:[%s304 + $0x2c] sm:$0xf]
        %v847 = vld [vmem:[%s304 + $0x30] sm:$0xf]
        %v848 = vld [vmem:[%s304 + $0x34] sm:$0xf]
        %v849 = vld [vmem:[%s304 + $0x38] sm:$0xf]
        %v850 = vld [vmem:[%s304 + $0x3c] sm:$0xf]
        %v867 = vunpack.c.l.b16 %v835
        %v868 = vunpack.c.l.b16 %v836
        %v869 = vunpack.c.l.b16 %v837
        %v870 = vunpack.c.l.b16 %v838
        %v871 = vunpack.c.l.b16 %v839
        %v872 = vunpack.c.l.b16 %v840
        %v873 = vunpack.c.l.b16 %v841
        %v874 = vunpack.c.l.b16 %v842
        %v875 = vunpack.c.l.b16 %v843
        %v876 = vunpack.c.l.b16 %v844
        %v877 = vunpack.c.l.b16 %v845
        %v878 = vunpack.c.l.b16 %v846
        %v879 = vunpack.c.l.b16 %v847
        %v880 = vunpack.c.l.b16 %v848
        %v881 = vunpack.c.l.b16 %v849
        %v882 = vunpack.c.l.b16 %v850
        %v883 = vpack.c.b16 %v868, %v867
        %v884 = vpack.c.b16 %v870, %v869
        %v885 = vpack.c.b16 %v872, %v871
        %v886 = vpack.c.b16 %v874, %v873
        %v887 = vpack.c.b16 %v876, %v875
        %v888 = vpack.c.b16 %v878, %v877
        %v889 = vpack.c.b16 %v880, %v879
        %v890 = vpack.c.b16 %v882, %v881
        %899 = vmatprep.subr.bf16.mxu0 0
        %900 = vmatpush1.bf16.msra.mxu0 %v883
        %901 = vmatprep.subr.bf16.mxu0 0
        %902 = vmatpush1.bf16.msra.mxu0 %v884
        %903 = vmatprep.subr.bf16.mxu0 0
        %904 = vmatpush1.bf16.msra.mxu0 %v885
        %905 = vmatprep.subr.bf16.mxu0 0
        %906 = vmatpush1.bf16.msra.mxu0 %v886
        %907 = vmatprep.subr.bf16.mxu0 0
        %908 = vmatpush1.bf16.msra.mxu0 %v887
        %909 = vmatprep.subr.bf16.mxu0 0
        %910 = vmatpush1.bf16.msra.mxu0 %v888
        %911 = vmatprep.subr.bf16.mxu0 0
        %912 = vmatpush1.bf16.msra.mxu0 %v889
        %913 = vmatprep.subr.bf16.mxu0 0
        %914 = vmatpush1.bf16.msra.mxu0 %v890
        %915 = vmatprep.subr.bf16.mxu0 0
        %916 = vmatpush1.bf16.msra.mxu0 0
        %917 = vmatprep.subr.bf16.mxu0 0
        %918 = vmatpush1.bf16.msra.mxu0 0
        %919 = vmatprep.subr.bf16.mxu0 0
        %920 = vmatpush1.bf16.msra.mxu0 0
        %921 = vmatprep.subr.bf16.mxu0 0
        %922 = vmatpush1.bf16.msra.mxu0 0
        %923 = vmatprep.subr.bf16.mxu0 0
        %924 = vmatpush1.bf16.msra.mxu0 0
        %925 = vmatprep.subr.bf16.mxu0 0
        %926 = vmatpush1.bf16.msra.mxu0 0
        %927 = vmatprep.subr.bf16.mxu0 0
        %928 = vmatpush1.bf16.msra.mxu0 0
        %929 = vmatprep.subr.bf16.mxu0 0
        %930 = vmatpush1.bf16.msra.mxu0 0
        %931 = vmatprep.mubr.bf16.mxu0 0
        %932 = vmatmul.mubr.bf16.gmra.mrb[0].mxu0 %v834
        %v933 = vpop.f32.mrb[0].mxu0
        %v934 = vadd.f32 0.0, %v933
        %v935 = vpop.f32.mrb[0].mxu0
        %v936 = vpop.f32.mrb[0].mxu0
        %v937 = vpop.f32.mrb[0].mxu0
        %938 = vdwg.mxu0
        %v939 = vadd.f32 %v833, %v934
        %vm940 = vcmask 130048
        %941 = vst.msk [vmem:[#allocation4] sm:$0xff] %vm940, %v939
        %942 = vst.msk [vmem:[#allocation2] sm:$0xff] %vm825, %v808
        // Predicated region
        $region45: #{tpu_custom_call.1} parent=35 // pred_check
          %p943 = pneg %p307
        $region46: #{tpu_custom_call.1} parent=35 // pred_check_branch
          %945 = sbr.rel (%p943) target = $region48
        $region47: #{tpu_custom_call.1} parent=35 // pred_region
          %v946 = vld [vmem:[#allocation3] sm:$0xff]
          %v947 = vrcp.pop %v946
          %v948 = vld [vmem:[#allocation4] sm:$0xff]
          %950 = vset.pattern.permute.xlu0 0
          %951 = vperm.xlu0 %950, %v947
          %v952 = vpop.permute.xlu0 %951
          %v954 = vmul.f32 %v948, %v952
          %955 = vst.msk [vmem:[%s280] sm:$0xff] %vm940, %v954
        $region48: #{tpu_custom_call.1} parent=35 // pred_fallthru
          _
        %s956 = sand.u32 %s153, 1
        %s957 = scalar_lea.sflag [#allocation6], %s956
        %s958 = sand.u32 %s153, 1
        %s959 = smul.addr %s958, 8
        %s960 = scalar_lea.vmem [#allocation8], %s959
        // Predicated region
        $region49: #{tpu_custom_call.1} parent=35 // pred_check
          %p961 = pneg %p163
        $region50: #{tpu_custom_call.1} parent=35 // pred_check_branch
          %963 = sbr.rel (%p961) target = $region52
        $region51: #{tpu_custom_call.1} parent=35 // pred_region
          %s965 = ssub.s32 128, 128
          %966 = vsyncadd %s957, %s965
          %s967 = sadd.s32 %s25, %s24
          %s968 = smul.addr %s967, 128
          %s969 = scalar_lea.hbm %s4, %s968
          %s971 = sshll.u32 %s960, 4
          %s972 = int_to_ptr.vmem [resolvable:$true] %s971
          %974 = dma.vmem_to_hbm [thread:$0]  %s972, 128, %s969, %s957
        $region52: #{tpu_custom_call.1} parent=35 // pred_fallthru
          _
      $region36: #{tpu_custom_call.1} parent=5 // pred_fallthru
        _
      %p975 = scmp.le.s32.totalorder 2, %s14
      // Predicated region
      $region53: #{tpu_custom_call.1} parent=5 // pred_check
        %p976 = pneg %p975
      $region54: #{tpu_custom_call.1} parent=5 // pred_check_branch
        %978 = sbr.rel (%p976) target = $region56
      $region55: #{tpu_custom_call.1} parent=5 // pred_region
        %s979 = ssub.s32 %s14, 2
        // Predicated region
        $region57: #{tpu_custom_call.1} parent=55 // pred_check
          %p980 = pneg %p169
        $region58: #{tpu_custom_call.1} parent=55 // pred_check_branch
          %982 = sbr.rel (%p980) target = $region60
        $region59: #{tpu_custom_call.1} parent=55 // pred_region
          %s983 = sand.u32 %s154, 1
          %s984 = scalar_lea.sflag [#allocation6], %s983
          %s985 = sand.u32 %s154, 1
          %s986 = smul.addr %s985, 8
          %s987 = scalar_lea.vmem [#allocation8], %s986
          %988 = dma.done %s984, 128
        $region60: #{tpu_custom_call.1} parent=55 // pred_fallthru
          _
      $region56: #{tpu_custom_call.1} parent=5 // pred_fallthru
        _
    $region6: #{tpu_custom_call.1} parent=1 // loop_footer
      %s18 = sadd.s32 1, %s14
    $region7: #{tpu_custom_call.1} parent=1 // loop_footer_branch
      %13 = sbr.rel target = $region3
    $region8: #{tpu_custom_call.1} parent=1 // loop_exit
      _
    %989 = vsyncpa [#allocation6], 1
    %s990 = scalar_lea.sflag [#allocation6], 1
    %991 = vsyncpa %s990, 1
    %992 = vsyncpa [#allocation7], 1
    %s993 = scalar_lea.sflag [#allocation7], 1
    %994 = vsyncpa %s993, 1

</llo_original>
